<compile_context>
chip_gen: v6e
topology: v6e:2x2x1
jax: 0.10.0
libtpu: 0.0.40
codegen_flags: <defaults>
</compile_context>

<pallas_src>
import jax
import jax.numpy as jnp
from jax.experimental import pallas as pl
from jax.experimental.pallas import tpu as pltpu


def _round_up(x: int, m: int) -> int:
    return ((x + m - 1) // m) * m


# ---------------------------------------------------------------------------
# Pallas kernel: fourier encoding + init linear + hidden layers (split skip
# weights, no concat in the loop) + output linear, for one tile of rows.
# ---------------------------------------------------------------------------
def _make_mlp_kernel(num_layers: int, skip: int, compute_dtype, neg_slope: float = 0.01):
    def lrelu(x):
        return jnp.where(x > 0, x, neg_slope * x)

    def kernel(p_ref, basis_t_ref, w_hid_ref, w_skip_ref, b_hid_ref,
               w_out_ref, b_out_ref, out_ref):
        # ---- fused Fourier positional encoding (all f32) --------------------
        p = p_ref[...]                                          # (TM, in_size) f32
        mapped = jnp.dot(p, basis_t_ref[...],
                         preferred_element_type=jnp.float32)    # (TM, freqs)
        init = jnp.concatenate([p, jnp.sin(mapped), jnp.cos(mapped)], axis=-1)

        init_bf = init.astype(compute_dtype)                    # for the init linear
        init_act_bf = lrelu(init).astype(compute_dtype)         # for the skip layers
        # (PyTorch applies the activation to cat([x, init]), i.e. to init as well.)

        # ---- init linear (no activation on its input) -----------------------
        x = jnp.dot(init_bf, w_skip_ref[0],
                    preferred_element_type=jnp.float32) + b_hid_ref[0]

        # ---- hidden layers: x = lrelu(x) @ w_h (+ lrelu(init) @ w_p) + b ----
        skip_j = 1
        for i in range(num_layers):
            h_bf = lrelu(x).astype(compute_dtype)
            acc = jnp.dot(h_bf, w_hid_ref[i], preferred_element_type=jnp.float32)
            if i != num_layers - 1 and i % skip == 0:
                acc = acc + jnp.dot(init_act_bf, w_skip_ref[skip_j],
                                    preferred_element_type=jnp.float32)
                skip_j += 1
            x = acc + b_hid_ref[i + 1]

        # ---- output linear ---------------------------------------------------
        y = jnp.dot(lrelu(x).astype(compute_dtype), w_out_ref[...],
                    preferred_element_type=jnp.float32) + b_out_ref[...]
        out_ref[...] = y.astype(out_ref.dtype)

    return kernel


# ---------------------------------------------------------------------------
# Parameter construction (deterministic, mimics torch.nn.Linear default init),
# packed into a handful of stacked arrays.
# ---------------------------------------------------------------------------
def _linear_params(key, in_features, out_features):
    kw, kb = jax.random.split(key)
    bound = 1.0 / (in_features ** 0.5)
    # Stored already transposed to (in, out).
    w = jax.random.uniform(kw, (in_features, out_features), jnp.float32, -bound, bound)
    b = jax.random.uniform(kb, (out_features,), jnp.float32, -bound, bound)
    return w, b


def make_skip_conn_mlp_params(key, num_layers=8, hidden_size=64, in_size=3,
                              out=3, skip=3, freqs=16, sigma=2 << 4,
                              weight_dtype=jnp.bfloat16):
    keys = jax.random.split(key, num_layers + 3)
    basis = sigma * jax.random.normal(keys[0], (freqs, in_size), jnp.float32)
    map_size = in_size + 2 * freqs
    dim_p = map_size  # latent_size = 0
    skip_size = hidden_size + dim_p

    w_init, b_init = _linear_params(keys[1], dim_p, hidden_size)

    w_hid_list, w_skip_list, b_list = [], [w_init], [b_init]
    for i in range(num_layers):
        is_skip = (i % skip == 0 and i != num_layers - 1)
        in_f = skip_size if is_skip else hidden_size
        w, b = _linear_params(keys[2 + i], in_f, hidden_size)
        if is_skip:
            w_hid_list.append(w[:hidden_size])   # (H, H)    multiplies lrelu(x)
            w_skip_list.append(w[hidden_size:])  # (dim_p,H) multiplies lrelu(init)
        else:
            w_hid_list.append(w)
        b_list.append(b)
    w_out, b_out = _linear_params(keys[2 + num_layers], hidden_size, out)

    return dict(
        basis_t=basis.T,                                      # (in_size, freqs) f32
        w_hid=jnp.stack(w_hid_list).astype(weight_dtype),     # (L, H, H)       bf16
        w_skip=jnp.stack(w_skip_list).astype(weight_dtype),   # (1+n_skip, dim_p, H)
        b_hid=jnp.stack(b_list),                              # (L+1, H)        f32
        w_out=w_out.astype(weight_dtype),                     # (H, out)        bf16
        b_out=b_out.reshape(1, out),                          # (1, out)        f32
        num_layers=num_layers, skip=skip, hidden=hidden_size,
        in_size=in_size, out=out, dim_p=dim_p,
        compute_dtype=weight_dtype)


# ---------------------------------------------------------------------------
# Wrapper: pallas_call over row tiles (encoding + full MLP fused in-kernel).
# ---------------------------------------------------------------------------
def skip_conn_mlp_forward(params, p, tile_m: int = 1024):
    in_size = params["in_size"]
    out_feat = params["out"]
    num_layers = params["num_layers"]
    skip = params["skip"]

    batches = p.shape[:-1]
    p_flat = p.reshape(-1, in_size).astype(jnp.float32)
    n = p_flat.shape[0]

    # Row tile: big to amortize per-step overhead, clamped for tiny inputs,
    # always a multiple of 8 (sublane).
    tile = min(tile_m, _round_up(max(n, 8), 8))
    n_pad = _round_up(n, tile)
    if n_pad != n:
        p_flat = jnp.pad(p_flat, ((0, n_pad - n), (0, 0)))
    grid = (n_pad // tile,)

    basis_t = params["basis_t"]
    w_hid, w_skip = params["w_hid"], params["w_skip"]
    b_hid, w_out, b_out = params["b_hid"], params["w_out"], params["b_out"]

    in_specs = [
        pl.BlockSpec((tile, in_size), lambda i: (i, 0)),        # streamed points
        pl.BlockSpec(basis_t.shape, lambda i: (0, 0)),          # fourier basis (T)
        pl.BlockSpec(w_hid.shape, lambda i: (0, 0, 0)),         # stacked hidden weights
        pl.BlockSpec(w_skip.shape, lambda i: (0, 0, 0)),        # init + skip weights
        pl.BlockSpec(b_hid.shape, lambda i: (0, 0)),            # stacked biases
        pl.BlockSpec(w_out.shape, lambda i: (0, 0)),            # output weight
        pl.BlockSpec(b_out.shape, lambda i: (0, 0)),            # output bias
    ]
    # TODO(synk): optionally pad the output to 128 lanes for fully dense vst if
    # profiling shows masked stores dominate (trades 42x more HBM write traffic).
    out_specs = pl.BlockSpec((tile, out_feat), lambda i: (i, 0))

    kernel = _make_mlp_kernel(num_layers, skip, params["compute_dtype"])

    out = pl.pallas_call(
        kernel,
        out_shape=jax.ShapeDtypeStruct((n_pad, out_feat), jnp.float32),
        grid=grid,
        in_specs=in_specs,
        out_specs=out_specs,
        compiler_params=pltpu.CompilerParams(
            dimension_semantics=("parallel",)),
    )(p_flat, basis_t, w_hid, w_skip, b_hid, w_out, b_out)

    return out[:n].reshape(batches + (out_feat,))


# ---------------------------------------------------------------------------
# Pure-JAX reference, written concat-style exactly like the PyTorch forward
# (same bf16 matmul operands / f32 accumulation as the kernel).
# ---------------------------------------------------------------------------
def skip_conn_mlp_reference(params, p):
    def lrelu(x):
        return jnp.where(x > 0, x, 0.01 * x)

    in_size = params["in_size"]
    L, skip = params["num_layers"], params["skip"]
    wd = params["compute_dtype"]
    batches = p.shape[:-1]

    pf = p.reshape(-1, in_size).astype(jnp.float32)
    mapped = pf @ params["basis_t"]
    init = jnp.concatenate([pf, jnp.sin(mapped), jnp.cos(mapped)], axis=-1)

    x = jnp.dot(init.astype(wd), params["w_skip"][0],
                preferred_element_type=jnp.float32) + params["b_hid"][0]
    skip_j = 1
    for i in range(L):
        if i != L - 1 and i % skip == 0:
            w_full = jnp.concatenate(
                [params["w_hid"][i], params["w_skip"][skip_j]], axis=0)
            skip_j += 1
            h = jnp.concatenate([x, init], axis=-1)
        else:
            w_full = params["w_hid"][i]
            h = x
        x = jnp.dot(lrelu(h).astype(wd), w_full,
                    preferred_element_type=jnp.float32) + params["b_hid"][i + 1]
    y = jnp.dot(lrelu(x).astype(wd), params["w_out"],
                preferred_element_type=jnp.float32) + params["b_out"]
    return y.reshape(batches + (params["out"],))


if __name__ == "__main__":
    key = jax.random.PRNGKey(0)
    k_param, k_input = jax.random.split(key)

    # Module defaults: num_layers=8, hidden=64, in_size=3, out=3, skip=3, freqs=16, sigma=32.
    params = make_skip_conn_mlp_params(k_param)

    # Small input: batches=(2, 16), in_size=3  ->  p: (2, 16, 3)
    p = jax.random.normal(k_input, (2, 16, 3), jnp.float32)

    y = skip_conn_mlp_forward(params, p)
    y = jax.block_until_ready(y)

    y_ref = skip_conn_mlp_reference(params, p)
    assert y.shape == (2, 16, 3), y.shape
    max_err = float(jnp.max(jnp.abs(y - y_ref)))
    assert jnp.allclose(y, y_ref, atol=2e-3, rtol=2e-2), max_err

    print("KERNEL_OK")
</pallas_src>

<mosaic_0001>
module attributes {stable_mosaic.version = 11 : i64} {
  func.func @kernel(%arg0: i32, %arg1: memref<32x3xf32, #tpu.memory_space<vmem>>, %arg2: memref<3x16xf32, #tpu.memory_space<vmem>>, %arg3: memref<8x64x64xbf16, #tpu.memory_space<vmem>>, %arg4: memref<4x35x64xbf16, #tpu.memory_space<vmem>>, %arg5: memref<9x64xf32, #tpu.memory_space<vmem>>, %arg6: memref<64x3xbf16, #tpu.memory_space<vmem>>, %arg7: memref<1x3xf32, #tpu.memory_space<vmem>>, %arg8: memref<32x3xf32, #tpu.memory_space<vmem>>) attributes {dimension_semantics = [#tpu.dimension_semantics<parallel>], iteration_bounds = array<i64: 1>, scalar_prefetch = 0 : i64, scratch_operands = 0 : i64, tpu.core_type = #tpu.core_type<tc>, window_params = [{transform_indices = @transform_0, window_bounds = array<i64: 32, 3>}, {pipeline_mode = #tpu.pipeline_mode<synchronous>, transform_indices = @transform_1, window_bounds = array<i64: 3, 16>}, {pipeline_mode = #tpu.pipeline_mode<synchronous>, transform_indices = @transform_2, window_bounds = array<i64: 8, 64, 64>}, {pipeline_mode = #tpu.pipeline_mode<synchronous>, transform_indices = @transform_3, window_bounds = array<i64: 4, 35, 64>}, {pipeline_mode = #tpu.pipeline_mode<synchronous>, transform_indices = @transform_4, window_bounds = array<i64: 9, 64>}, {pipeline_mode = #tpu.pipeline_mode<synchronous>, transform_indices = @transform_5, window_bounds = array<i64: 64, 3>}, {pipeline_mode = #tpu.pipeline_mode<synchronous>, transform_indices = @transform_6, window_bounds = array<i64: 1, 3>}, {transform_indices = @transform_7, window_bounds = array<i64: 32, 3>}]} {
    %c0 = arith.constant 0 : index
    %c0_0 = arith.constant 0 : index
    %0 = vector.load %arg1[%c0, %c0_0] : memref<32x3xf32, #tpu.memory_space<vmem>>, vector<32x3xf32>
    %c0_1 = arith.constant 0 : index
    %c0_2 = arith.constant 0 : index
    %1 = vector.load %arg2[%c0_1, %c0_2] : memref<3x16xf32, #tpu.memory_space<vmem>>, vector<3x16xf32>
    %cst = arith.constant dense<0.000000e+00> : vector<32x16xf32>
    %2 = tpu.matmul %0, %1, %cst {dimension_numbers = #tpu.dot_dimension_numbers<[1], [0], [0], [1], [0, 0, 1, 1], [], []>} : vector<32x3xf32>, vector<3x16xf32>, vector<32x16xf32> -> vector<32x16xf32>
    %3 = math.sin %2 : vector<32x16xf32>
    %4 = math.cos %2 : vector<32x16xf32>
    %5 = tpu.concatenate %0, %3, %4 in 1 : vector<32x3xf32>, vector<32x16xf32>, vector<32x16xf32> -> vector<32x35xf32>
    %6 = arith.truncf %5 : vector<32x35xf32> to vector<32x35xbf16>
    %cst_3 = arith.constant 0.000000e+00 : f32
    %7 = vector.broadcast %cst_3 : f32 to vector<32x35xf32>
    %8 = arith.cmpf ogt, %5, %7 : vector<32x35xf32>
    %cst_4 = arith.constant 0.00999999977 : f32
    %9 = vector.broadcast %cst_4 : f32 to vector<32x35xf32>
    %10 = arith.mulf %9, %5 : vector<32x35xf32>
    %11 = arith.select %8, %5, %10 : vector<32x35xi1>, vector<32x35xf32>
    %12 = arith.truncf %11 : vector<32x35xf32> to vector<32x35xbf16>
    %c0_5 = arith.constant 0 : index
    %c0_6 = arith.constant 0 : index
    %c0_7 = arith.constant 0 : index
    %13 = vector.load %arg4[%c0_5, %c0_6, %c0_7] : memref<4x35x64xbf16, #tpu.memory_space<vmem>>, vector<1x35x64xbf16>
    %14 = vector.shape_cast %13 : vector<1x35x64xbf16> to vector<35x64xbf16>
    %cst_8 = arith.constant dense<0.000000e+00> : vector<32x64xf32>
    %15 = tpu.matmul %6, %14, %cst_8 {dimension_numbers = #tpu.dot_dimension_numbers<[1], [0], [0], [1], [0, 0, 1, 1], [], []>} : vector<32x35xbf16>, vector<35x64xbf16>, vector<32x64xf32> -> vector<32x64xf32>
    %c0_9 = arith.constant 0 : index
    %c0_10 = arith.constant 0 : index
    %16 = vector.load %arg5[%c0_9, %c0_10] : memref<9x64xf32, #tpu.memory_space<vmem>>, vector<1x64xf32>
    %17 = vector.shape_cast %16 : vector<1x64xf32> to vector<64xf32>
    %18 = vector.shape_cast %17 : vector<64xf32> to vector<1x64xf32>
    %19 = vector.broadcast %18 : vector<1x64xf32> to vector<32x64xf32>
    %20 = arith.addf %15, %19 : vector<32x64xf32>
    %cst_11 = arith.constant 0.000000e+00 : f32
    %21 = vector.broadcast %cst_11 : f32 to vector<32x64xf32>
    %22 = arith.cmpf ogt, %20, %21 : vector<32x64xf32>
    %cst_12 = arith.constant 0.00999999977 : f32
    %23 = vector.broadcast %cst_12 : f32 to vector<32x64xf32>
    %24 = arith.mulf %23, %20 : vector<32x64xf32>
    %25 = arith.select %22, %20, %24 : vector<32x64xi1>, vector<32x64xf32>
    %26 = arith.truncf %25 : vector<32x64xf32> to vector<32x64xbf16>
    %c0_13 = arith.constant 0 : index
    %c0_14 = arith.constant 0 : index
    %c0_15 = arith.constant 0 : index
    %27 = vector.load %arg3[%c0_13, %c0_14, %c0_15] : memref<8x64x64xbf16, #tpu.memory_space<vmem>>, vector<1x64x64xbf16>
    %28 = vector.shape_cast %27 : vector<1x64x64xbf16> to vector<64x64xbf16>
    %cst_16 = arith.constant dense<0.000000e+00> : vector<32x64xf32>
    %29 = tpu.matmul %26, %28, %cst_16 {dimension_numbers = #tpu.dot_dimension_numbers<[1], [0], [0], [1], [0, 0, 1, 1], [], []>} : vector<32x64xbf16>, vector<64x64xbf16>, vector<32x64xf32> -> vector<32x64xf32>
    %c1 = arith.constant 1 : index
    %c0_17 = arith.constant 0 : index
    %c0_18 = arith.constant 0 : index
    %30 = vector.load %arg4[%c1, %c0_17, %c0_18] : memref<4x35x64xbf16, #tpu.memory_space<vmem>>, vector<1x35x64xbf16>
    %31 = vector.shape_cast %30 : vector<1x35x64xbf16> to vector<35x64xbf16>
    %cst_19 = arith.constant dense<0.000000e+00> : vector<32x64xf32>
    %32 = tpu.matmul %12, %31, %cst_19 {dimension_numbers = #tpu.dot_dimension_numbers<[1], [0], [0], [1], [0, 0, 1, 1], [], []>} : vector<32x35xbf16>, vector<35x64xbf16>, vector<32x64xf32> -> vector<32x64xf32>
    %33 = arith.addf %29, %32 : vector<32x64xf32>
    %c1_20 = arith.constant 1 : index
    %c0_21 = arith.constant 0 : index
    %34 = vector.load %arg5[%c1_20, %c0_21] : memref<9x64xf32, #tpu.memory_space<vmem>>, vector<1x64xf32>
    %35 = vector.shape_cast %34 : vector<1x64xf32> to vector<64xf32>
    %36 = vector.shape_cast %35 : vector<64xf32> to vector<1x64xf32>
    %37 = vector.broadcast %36 : vector<1x64xf32> to vector<32x64xf32>
    %38 = arith.addf %33, %37 : vector<32x64xf32>
    %cst_22 = arith.constant 0.000000e+00 : f32
    %39 = vector.broadcast %cst_22 : f32 to vector<32x64xf32>
    %40 = arith.cmpf ogt, %38, %39 : vector<32x64xf32>
    %cst_23 = arith.constant 0.00999999977 : f32
    %41 = vector.broadcast %cst_23 : f32 to vector<32x64xf32>
    %42 = arith.mulf %41, %38 : vector<32x64xf32>
    %43 = arith.select %40, %38, %42 : vector<32x64xi1>, vector<32x64xf32>
    %44 = arith.truncf %43 : vector<32x64xf32> to vector<32x64xbf16>
    %c1_24 = arith.constant 1 : index
    %c0_25 = arith.constant 0 : index
    %c0_26 = arith.constant 0 : index
    %45 = vector.load %arg3[%c1_24, %c0_25, %c0_26] : memref<8x64x64xbf16, #tpu.memory_space<vmem>>, vector<1x64x64xbf16>
    %46 = vector.shape_cast %45 : vector<1x64x64xbf16> to vector<64x64xbf16>
    %cst_27 = arith.constant dense<0.000000e+00> : vector<32x64xf32>
    %47 = tpu.matmul %44, %46, %cst_27 {dimension_numbers = #tpu.dot_dimension_numbers<[1], [0], [0], [1], [0, 0, 1, 1], [], []>} : vector<32x64xbf16>, vector<64x64xbf16>, vector<32x64xf32> -> vector<32x64xf32>
    %c2 = arith.constant 2 : index
    %c0_28 = arith.constant 0 : index
    %48 = vector.load %arg5[%c2, %c0_28] : memref<9x64xf32, #tpu.memory_space<vmem>>, vector<1x64xf32>
    %49 = vector.shape_cast %48 : vector<1x64xf32> to vector<64xf32>
    %50 = vector.shape_cast %49 : vector<64xf32> to vector<1x64xf32>
    %51 = vector.broadcast %50 : vector<1x64xf32> to vector<32x64xf32>
    %52 = arith.addf %47, %51 : vector<32x64xf32>
    %cst_29 = arith.constant 0.000000e+00 : f32
    %53 = vector.broadcast %cst_29 : f32 to vector<32x64xf32>
    %54 = arith.cmpf ogt, %52, %53 : vector<32x64xf32>
    %cst_30 = arith.constant 0.00999999977 : f32
    %55 = vector.broadcast %cst_30 : f32 to vector<32x64xf32>
    %56 = arith.mulf %55, %52 : vector<32x64xf32>
    %57 = arith.select %54, %52, %56 : vector<32x64xi1>, vector<32x64xf32>
    %58 = arith.truncf %57 : vector<32x64xf32> to vector<32x64xbf16>
    %c2_31 = arith.constant 2 : index
    %c0_32 = arith.constant 0 : index
    %c0_33 = arith.constant 0 : index
    %59 = vector.load %arg3[%c2_31, %c0_32, %c0_33] : memref<8x64x64xbf16, #tpu.memory_space<vmem>>, vector<1x64x64xbf16>
    %60 = vector.shape_cast %59 : vector<1x64x64xbf16> to vector<64x64xbf16>
    %cst_34 = arith.constant dense<0.000000e+00> : vector<32x64xf32>
    %61 = tpu.matmul %58, %60, %cst_34 {dimension_numbers = #tpu.dot_dimension_numbers<[1], [0], [0], [1], [0, 0, 1, 1], [], []>} : vector<32x64xbf16>, vector<64x64xbf16>, vector<32x64xf32> -> vector<32x64xf32>
    %c3 = arith.constant 3 : index
    %c0_35 = arith.constant 0 : index
    %62 = vector.load %arg5[%c3, %c0_35] : memref<9x64xf32, #tpu.memory_space<vmem>>, vector<1x64xf32>
    %63 = vector.shape_cast %62 : vector<1x64xf32> to vector<64xf32>
    %64 = vector.shape_cast %63 : vector<64xf32> to vector<1x64xf32>
    %65 = vector.broadcast %64 : vector<1x64xf32> to vector<32x64xf32>
    %66 = arith.addf %61, %65 : vector<32x64xf32>
    %cst_36 = arith.constant 0.000000e+00 : f32
    %67 = vector.broadcast %cst_36 : f32 to vector<32x64xf32>
    %68 = arith.cmpf ogt, %66, %67 : vector<32x64xf32>
    %cst_37 = arith.constant 0.00999999977 : f32
    %69 = vector.broadcast %cst_37 : f32 to vector<32x64xf32>
    %70 = arith.mulf %69, %66 : vector<32x64xf32>
    %71 = arith.select %68, %66, %70 : vector<32x64xi1>, vector<32x64xf32>
    %72 = arith.truncf %71 : vector<32x64xf32> to vector<32x64xbf16>
    %c3_38 = arith.constant 3 : index
    %c0_39 = arith.constant 0 : index
    %c0_40 = arith.constant 0 : index
    %73 = vector.load %arg3[%c3_38, %c0_39, %c0_40] : memref<8x64x64xbf16, #tpu.memory_space<vmem>>, vector<1x64x64xbf16>
    %74 = vector.shape_cast %73 : vector<1x64x64xbf16> to vector<64x64xbf16>
    %cst_41 = arith.constant dense<0.000000e+00> : vector<32x64xf32>
    %75 = tpu.matmul %72, %74, %cst_41 {dimension_numbers = #tpu.dot_dimension_numbers<[1], [0], [0], [1], [0, 0, 1, 1], [], []>} : vector<32x64xbf16>, vector<64x64xbf16>, vector<32x64xf32> -> vector<32x64xf32>
    %c2_42 = arith.constant 2 : index
    %c0_43 = arith.constant 0 : index
    %c0_44 = arith.constant 0 : index
    %76 = vector.load %arg4[%c2_42, %c0_43, %c0_44] : memref<4x35x64xbf16, #tpu.memory_space<vmem>>, vector<1x35x64xbf16>
    %77 = vector.shape_cast %76 : vector<1x35x64xbf16> to vector<35x64xbf16>
    %cst_45 = arith.constant dense<0.000000e+00> : vector<32x64xf32>
    %78 = tpu.matmul %12, %77, %cst_45 {dimension_numbers = #tpu.dot_dimension_numbers<[1], [0], [0], [1], [0, 0, 1, 1], [], []>} : vector<32x35xbf16>, vector<35x64xbf16>, vector<32x64xf32> -> vector<32x64xf32>
    %79 = arith.addf %75, %78 : vector<32x64xf32>
    %c4 = arith.constant 4 : index
    %c0_46 = arith.constant 0 : index
    %80 = vector.load %arg5[%c4, %c0_46] : memref<9x64xf32, #tpu.memory_space<vmem>>, vector<1x64xf32>
    %81 = vector.shape_cast %80 : vector<1x64xf32> to vector<64xf32>
    %82 = vector.shape_cast %81 : vector<64xf32> to vector<1x64xf32>
    %83 = vector.broadcast %82 : vector<1x64xf32> to vector<32x64xf32>
    %84 = arith.addf %79, %83 : vector<32x64xf32>
    %cst_47 = arith.constant 0.000000e+00 : f32
    %85 = vector.broadcast %cst_47 : f32 to vector<32x64xf32>
    %86 = arith.cmpf ogt, %84, %85 : vector<32x64xf32>
    %cst_48 = arith.constant 0.00999999977 : f32
    %87 = vector.broadcast %cst_48 : f32 to vector<32x64xf32>
    %88 = arith.mulf %87, %84 : vector<32x64xf32>
    %89 = arith.select %86, %84, %88 : vector<32x64xi1>, vector<32x64xf32>
    %90 = arith.truncf %89 : vector<32x64xf32> to vector<32x64xbf16>
    %c4_49 = arith.constant 4 : index
    %c0_50 = arith.constant 0 : index
    %c0_51 = arith.constant 0 : index
    %91 = vector.load %arg3[%c4_49, %c0_50, %c0_51] : memref<8x64x64xbf16, #tpu.memory_space<vmem>>, vector<1x64x64xbf16>
    %92 = vector.shape_cast %91 : vector<1x64x64xbf16> to vector<64x64xbf16>
    %cst_52 = arith.constant dense<0.000000e+00> : vector<32x64xf32>
    %93 = tpu.matmul %90, %92, %cst_52 {dimension_numbers = #tpu.dot_dimension_numbers<[1], [0], [0], [1], [0, 0, 1, 1], [], []>} : vector<32x64xbf16>, vector<64x64xbf16>, vector<32x64xf32> -> vector<32x64xf32>
    %c5 = arith.constant 5 : index
    %c0_53 = arith.constant 0 : index
    %94 = vector.load %arg5[%c5, %c0_53] : memref<9x64xf32, #tpu.memory_space<vmem>>, vector<1x64xf32>
    %95 = vector.shape_cast %94 : vector<1x64xf32> to vector<64xf32>
    %96 = vector.shape_cast %95 : vector<64xf32> to vector<1x64xf32>
    %97 = vector.broadcast %96 : vector<1x64xf32> to vector<32x64xf32>
    %98 = arith.addf %93, %97 : vector<32x64xf32>
    %cst_54 = arith.constant 0.000000e+00 : f32
    %99 = vector.broadcast %cst_54 : f32 to vector<32x64xf32>
    %100 = arith.cmpf ogt, %98, %99 : vector<32x64xf32>
    %cst_55 = arith.constant 0.00999999977 : f32
    %101 = vector.broadcast %cst_55 : f32 to vector<32x64xf32>
    %102 = arith.mulf %101, %98 : vector<32x64xf32>
    %103 = arith.select %100, %98, %102 : vector<32x64xi1>, vector<32x64xf32>
    %104 = arith.truncf %103 : vector<32x64xf32> to vector<32x64xbf16>
    %c5_56 = arith.constant 5 : index
    %c0_57 = arith.constant 0 : index
    %c0_58 = arith.constant 0 : index
    %105 = vector.load %arg3[%c5_56, %c0_57, %c0_58] : memref<8x64x64xbf16, #tpu.memory_space<vmem>>, vector<1x64x64xbf16>
    %106 = vector.shape_cast %105 : vector<1x64x64xbf16> to vector<64x64xbf16>
    %cst_59 = arith.constant dense<0.000000e+00> : vector<32x64xf32>
    %107 = tpu.matmul %104, %106, %cst_59 {dimension_numbers = #tpu.dot_dimension_numbers<[1], [0], [0], [1], [0, 0, 1, 1], [], []>} : vector<32x64xbf16>, vector<64x64xbf16>, vector<32x64xf32> -> vector<32x64xf32>
    %c6 = arith.constant 6 : index
    %c0_60 = arith.constant 0 : index
    %108 = vector.load %arg5[%c6, %c0_60] : memref<9x64xf32, #tpu.memory_space<vmem>>, vector<1x64xf32>
    %109 = vector.shape_cast %108 : vector<1x64xf32> to vector<64xf32>
    %110 = vector.shape_cast %109 : vector<64xf32> to vector<1x64xf32>
    %111 = vector.broadcast %110 : vector<1x64xf32> to vector<32x64xf32>
    %112 = arith.addf %107, %111 : vector<32x64xf32>
    %cst_61 = arith.constant 0.000000e+00 : f32
    %113 = vector.broadcast %cst_61 : f32 to vector<32x64xf32>
    %114 = arith.cmpf ogt, %112, %113 : vector<32x64xf32>
    %cst_62 = arith.constant 0.00999999977 : f32
    %115 = vector.broadcast %cst_62 : f32 to vector<32x64xf32>
    %116 = arith.mulf %115, %112 : vector<32x64xf32>
    %117 = arith.select %114, %112, %116 : vector<32x64xi1>, vector<32x64xf32>
    %118 = arith.truncf %117 : vector<32x64xf32> to vector<32x64xbf16>
    %c6_63 = arith.constant 6 : index
    %c0_64 = arith.constant 0 : index
    %c0_65 = arith.constant 0 : index
    %119 = vector.load %arg3[%c6_63, %c0_64, %c0_65] : memref<8x64x64xbf16, #tpu.memory_space<vmem>>, vector<1x64x64xbf16>
    %120 = vector.shape_cast %119 : vector<1x64x64xbf16> to vector<64x64xbf16>
    %cst_66 = arith.constant dense<0.000000e+00> : vector<32x64xf32>
    %121 = tpu.matmul %118, %120, %cst_66 {dimension_numbers = #tpu.dot_dimension_numbers<[1], [0], [0], [1], [0, 0, 1, 1], [], []>} : vector<32x64xbf16>, vector<64x64xbf16>, vector<32x64xf32> -> vector<32x64xf32>
    %c3_67 = arith.constant 3 : index
    %c0_68 = arith.constant 0 : index
    %c0_69 = arith.constant 0 : index
    %122 = vector.load %arg4[%c3_67, %c0_68, %c0_69] : memref<4x35x64xbf16, #tpu.memory_space<vmem>>, vector<1x35x64xbf16>
    %123 = vector.shape_cast %122 : vector<1x35x64xbf16> to vector<35x64xbf16>
    %cst_70 = arith.constant dense<0.000000e+00> : vector<32x64xf32>
    %124 = tpu.matmul %12, %123, %cst_70 {dimension_numbers = #tpu.dot_dimension_numbers<[1], [0], [0], [1], [0, 0, 1, 1], [], []>} : vector<32x35xbf16>, vector<35x64xbf16>, vector<32x64xf32> -> vector<32x64xf32>
    %125 = arith.addf %121, %124 : vector<32x64xf32>
    %c7 = arith.constant 7 : index
    %c0_71 = arith.constant 0 : index
    %126 = vector.load %arg5[%c7, %c0_71] : memref<9x64xf32, #tpu.memory_space<vmem>>, vector<1x64xf32>
    %127 = vector.shape_cast %126 : vector<1x64xf32> to vector<64xf32>
    %128 = vector.shape_cast %127 : vector<64xf32> to vector<1x64xf32>
    %129 = vector.broadcast %128 : vector<1x64xf32> to vector<32x64xf32>
    %130 = arith.addf %125, %129 : vector<32x64xf32>
    %cst_72 = arith.constant 0.000000e+00 : f32
    %131 = vector.broadcast %cst_72 : f32 to vector<32x64xf32>
    %132 = arith.cmpf ogt, %130, %131 : vector<32x64xf32>
    %cst_73 = arith.constant 0.00999999977 : f32
    %133 = vector.broadcast %cst_73 : f32 to vector<32x64xf32>
    %134 = arith.mulf %133, %130 : vector<32x64xf32>
    %135 = arith.select %132, %130, %134 : vector<32x64xi1>, vector<32x64xf32>
    %136 = arith.truncf %135 : vector<32x64xf32> to vector<32x64xbf16>
    %c7_74 = arith.constant 7 : index
    %c0_75 = arith.constant 0 : index
    %c0_76 = arith.constant 0 : index
    %137 = vector.load %arg3[%c7_74, %c0_75, %c0_76] : memref<8x64x64xbf16, #tpu.memory_space<vmem>>, vector<1x64x64xbf16>
    %138 = vector.shape_cast %137 : vector<1x64x64xbf16> to vector<64x64xbf16>
    %cst_77 = arith.constant dense<0.000000e+00> : vector<32x64xf32>
    %139 = tpu.matmul %136, %138, %cst_77 {dimension_numbers = #tpu.dot_dimension_numbers<[1], [0], [0], [1], [0, 0, 1, 1], [], []>} : vector<32x64xbf16>, vector<64x64xbf16>, vector<32x64xf32> -> vector<32x64xf32>
    %c8 = arith.constant 8 : index
    %c0_78 = arith.constant 0 : index
    %140 = vector.load %arg5[%c8, %c0_78] : memref<9x64xf32, #tpu.memory_space<vmem>>, vector<1x64xf32>
    %141 = vector.shape_cast %140 : vector<1x64xf32> to vector<64xf32>
    %142 = vector.shape_cast %141 : vector<64xf32> to vector<1x64xf32>
    %143 = vector.broadcast %142 : vector<1x64xf32> to vector<32x64xf32>
    %144 = arith.addf %139, %143 : vector<32x64xf32>
    %cst_79 = arith.constant 0.000000e+00 : f32
    %145 = vector.broadcast %cst_79 : f32 to vector<32x64xf32>
    %146 = arith.cmpf ogt, %144, %145 : vector<32x64xf32>
    %cst_80 = arith.constant 0.00999999977 : f32
    %147 = vector.broadcast %cst_80 : f32 to vector<32x64xf32>
    %148 = arith.mulf %147, %144 : vector<32x64xf32>
    %149 = arith.select %146, %144, %148 : vector<32x64xi1>, vector<32x64xf32>
    %150 = arith.truncf %149 : vector<32x64xf32> to vector<32x64xbf16>
    %c0_81 = arith.constant 0 : index
    %c0_82 = arith.constant 0 : index
    %151 = vector.load %arg6[%c0_81, %c0_82] : memref<64x3xbf16, #tpu.memory_space<vmem>>, vector<64x3xbf16>
    %cst_83 = arith.constant dense<0.000000e+00> : vector<32x3xf32>
    %152 = tpu.matmul %150, %151, %cst_83 {dimension_numbers = #tpu.dot_dimension_numbers<[1], [0], [0], [1], [0, 0, 1, 1], [], []>} : vector<32x64xbf16>, vector<64x3xbf16>, vector<32x3xf32> -> vector<32x3xf32>
    %c0_84 = arith.constant 0 : index
    %c0_85 = arith.constant 0 : index
    %153 = vector.load %arg7[%c0_84, %c0_85] : memref<1x3xf32, #tpu.memory_space<vmem>>, vector<1x3xf32>
    %154 = vector.broadcast %153 : vector<1x3xf32> to vector<32x3xf32>
    %155 = arith.addf %152, %154 : vector<32x3xf32>
    %c0_86 = arith.constant 0 : index
    %c0_87 = arith.constant 0 : index
    %156 = vector.load %arg8[%c0_86, %c0_87] : memref<32x3xf32, #tpu.memory_space<vmem>>, vector<32x3xf32>
    tpu.vector_store %arg8[%c0_86, %c0_87], %155 {strides = array<i32>} : memref<32x3xf32, #tpu.memory_space<vmem>>, vector<32x3xf32>,
    return
  }
  func.func @transform_0(%arg0: i32) -> (i32, i32) {
    %c0_i32 = arith.constant 0 : i32
    %c0_i32_0 = arith.constant 0 : i32
    return %arg0, %c0_i32 : i32, i32
  }
  func.func @transform_1(%arg0: i32) -> (i32, i32) {
    %c0_i32 = arith.constant 0 : i32
    %c0_i32_0 = arith.constant 0 : i32
    %c0_i32_1 = arith.constant 0 : i32
    return %c0_i32, %c0_i32_0 : i32, i32
  }
  func.func @transform_2(%arg0: i32) -> (i32, i32, i32) {
    %c0_i32 = arith.constant 0 : i32
    %c0_i32_0 = arith.constant 0 : i32
    %c0_i32_1 = arith.constant 0 : i32
    %c0_i32_2 = arith.constant 0 : i32
    return %c0_i32, %c0_i32_0, %c0_i32_1 : i32, i32, i32
  }
  func.func @transform_3(%arg0: i32) -> (i32, i32, i32) {
    %c0_i32 = arith.constant 0 : i32
    %c0_i32_0 = arith.constant 0 : i32
    %c0_i32_1 = arith.constant 0 : i32
    %c0_i32_2 = arith.constant 0 : i32
    return %c0_i32, %c0_i32_0, %c0_i32_1 : i32, i32, i32
  }
  func.func @transform_4(%arg0: i32) -> (i32, i32) {
    %c0_i32 = arith.constant 0 : i32
    %c0_i32_0 = arith.constant 0 : i32
    %c0_i32_1 = arith.constant 0 : i32
    return %c0_i32, %c0_i32_0 : i32, i32
  }
  func.func @transform_5(%arg0: i32) -> (i32, i32) {
    %c0_i32 = arith.constant 0 : i32
    %c0_i32_0 = arith.constant 0 : i32
    %c0_i32_1 = arith.constant 0 : i32
    return %c0_i32, %c0_i32_0 : i32, i32
  }
  func.func @transform_6(%arg0: i32) -> (i32, i32) {
    %c0_i32 = arith.constant 0 : i32
    %c0_i32_0 = arith.constant 0 : i32
    %c0_i32_1 = arith.constant 0 : i32
    return %c0_i32, %c0_i32_0 : i32, i32
  }
  func.func @transform_7(%arg0: i32) -> (i32, i32) {
    %c0_i32 = arith.constant 0 : i32
    %c0_i32_0 = arith.constant 0 : i32
    return %arg0, %c0_i32 : i32, i32
  }
}

</mosaic_0001>

<llo_original>
// kernel: tpu_custom_call.1
$region0: #{tpu_custom_call.1}
  #allocation0 [shape = 'u32[]', space=smem, size = 0x4, offset = 0x4, fixed_abs, tag = 'smem constant byte address 0x4 - core index']
  #allocation1 [shape = 'u32[144,128]{1,0:T(1,128)}', space=vmem, size = 0x12000, scoped, tag = 'internal scratch']
  %s0 = inlined_call_operand.vmem [shape: f32[32,3], index: 0, kind: input, shape index: {}]
  %s1 = inlined_call_operand.vmem [shape: f32[3,16], index: 1, kind: input, shape index: {}]
  %s2 = inlined_call_operand.hbm [shape: bf16[8,64,64], index: 2, kind: input, shape index: {}]
  %s3 = inlined_call_operand.vmem [shape: bf16[4,35,64], index: 3, kind: input, shape index: {}]
  %s4 = inlined_call_operand.vmem [shape: f32[9,64], index: 4, kind: input, shape index: {}]
  %s5 = inlined_call_operand.vmem [shape: bf16[64,3], index: 5, kind: input, shape index: {}]
  %s6 = inlined_call_operand.vmem [shape: f32[1,3], index: 6, kind: input, shape index: {}]
  %s7 = inlined_call_operand.vmem [shape: f32[32,3], index: 7, kind: output, shape index: {}]
  %s8 = sld [smem:[#allocation0]]
  $region42: #{tpu_custom_call.1} parent=0
    _
  %s10 = ssub.s32 1, %s8
  %s11 = scalar_select 0, %s10, %s8
  $region1: #{tpu_custom_call.1} parent=0
    #allocation2 [shape = 'u8[131072]{0}', space=vmem, size = 0x20000, scoped, tag = 'input window, operand 2, single buffered']
    #allocation3 [shape = 's32[1]{0}', space=sflag, size = 0x4, scoped, tag = 'scoped memory for tpu_custom_call.1']
    %12 = vsyncpa [#allocation3], 0
    // Predicated region
    $region2: #{tpu_custom_call.1} parent=1 // pred_check
      _
    $region3: #{tpu_custom_call.1} parent=1 // pred_check_branch
      %14 = sbr.rel (0) target = $region5
    $region4: #{tpu_custom_call.1} parent=1 // pred_region
      _
    $region5: #{tpu_custom_call.1} parent=1 // pred_fallthru
      _
    // Predicated region
    $region6: #{tpu_custom_call.1} parent=1 // pred_check
      _
    $region7: #{tpu_custom_call.1} parent=1 // pred_check_branch
      %16 = sbr.rel (0) target = $region9
    $region8: #{tpu_custom_call.1} parent=1 // pred_region
      _
    $region9: #{tpu_custom_call.1} parent=1 // pred_fallthru
      _
    // Predicated region
    $region10: #{tpu_custom_call.1} parent=1 // pred_check
      _
    $region11: #{tpu_custom_call.1} parent=1 // pred_check_branch
      %18 = sbr.rel (0) target = $region13
    $region12: #{tpu_custom_call.1} parent=1 // pred_region
      %s20 = ssub.s32 4096, 4096
      %21 = vsyncadd [#allocation3], %s20
      %s22 = sshll.u32 [#allocation2], 4
      %s23 = int_to_ptr.vmem [resolvable:$true] %s22
      %28 = dma.hbm_to_vmem [thread:$0]  %s2, 4096, %s23, [#allocation3], 64, 64, 4
    $region13: #{tpu_custom_call.1} parent=1 // pred_fallthru
      _
    // Predicated region
    $region14: #{tpu_custom_call.1} parent=1 // pred_check
      _
    $region15: #{tpu_custom_call.1} parent=1 // pred_check_branch
      %30 = sbr.rel (0) target = $region17
    $region16: #{tpu_custom_call.1} parent=1 // pred_region
      _
    $region17: #{tpu_custom_call.1} parent=1 // pred_fallthru
      _
    // Predicated region
    $region18: #{tpu_custom_call.1} parent=1 // pred_check
      _
    $region19: #{tpu_custom_call.1} parent=1 // pred_check_branch
      %32 = sbr.rel (0) target = $region21
    $region20: #{tpu_custom_call.1} parent=1 // pred_region
      _
    $region21: #{tpu_custom_call.1} parent=1 // pred_fallthru
      _
    // Predicated region
    $region22: #{tpu_custom_call.1} parent=1 // pred_check
      _
    $region23: #{tpu_custom_call.1} parent=1 // pred_check_branch
      %34 = sbr.rel (0) target = $region25
    $region24: #{tpu_custom_call.1} parent=1 // pred_region
      _
    $region25: #{tpu_custom_call.1} parent=1 // pred_fallthru
      _
    // Predicated region
    $region26: #{tpu_custom_call.1} parent=1 // pred_check
      _
    $region27: #{tpu_custom_call.1} parent=1 // pred_check_branch
      %36 = sbr.rel (0) target = $region29
    $region28: #{tpu_custom_call.1} parent=1 // pred_region
      _
    $region29: #{tpu_custom_call.1} parent=1 // pred_fallthru
      _
    // Predicated region
    $region30: #{tpu_custom_call.1} parent=1 // pred_check
      _
    $region31: #{tpu_custom_call.1} parent=1 // pred_check_branch
      %38 = sbr.rel (0) target = $region33
    $region32: #{tpu_custom_call.1} parent=1 // pred_region
      %39 = dma.done [#allocation3], 4096
    $region33: #{tpu_custom_call.1} parent=1 // pred_fallthru
      _
    %v41 = vld [vmem:[%s0] sm:$0xff]
    %v42 = vld [vmem:[%s0 + $0x8] sm:$0xff]
    %v43 = vld [vmem:[%s0 + $0x10] sm:$0xff]
    %v44 = vld [vmem:[%s0 + $0x18] sm:$0xff]
    %v45 = vld [vmem:[%s1] sm:$0x7]
    %vm46 = vcmask 23552
    %v48 = vsel %vm46, %v41, 0
    %v51 = vsel %vm46, %v42, 0
    %v54 = vsel %vm46, %v43, 0
    %v57 = vsel %vm46, %v44, 0
    %vm59 = vcmask 1042432
    %v61 = vsel %vm59, %v45, 0
    %63 = vmatprep.subr.mxu0 0.0
    %64 = vmatpush1.msra.mxu0 0.0
    %65 = vmatprep.subr.mxu0 0.0
    %66 = vmatpush1.msra.mxu0 0.0
    %67 = vmatprep.subr.mxu0 0.0
    %68 = vmatpush1.msra.mxu0 0.0
    %69 = vmatprep.subr.mxu0 0.0
    %70 = vmatpush1.msra.mxu0 0.0
    %71 = vmatprep.subr.mxu0 0.0
    %72 = vmatpush1.msra.mxu0 0.0
    %73 = vmatprep.subr.mxu0 0.0
    %74 = vmatpush1.msra.mxu0 0.0
    %75 = vmatprep.subr.mxu0 0.0
    %76 = vmatpush1.msra.mxu0 0.0
    %77 = vmatprep.subr.mxu0 0.0
    %78 = vmatpush1.msra.mxu0 0.0
    %79 = vmatprep.subr.mxu0 0.0
    %80 = vmatpush1.msra.mxu0 0.0
    %81 = vmatprep.subr.mxu0 0.0
    %82 = vmatpush1.msra.mxu0 0.0
    %83 = vmatprep.subr.mxu0 0.0
    %84 = vmatpush1.msra.mxu0 0.0
    %85 = vmatprep.subr.mxu0 0.0
    %86 = vmatpush1.msra.mxu0 0.0
    %87 = vmatprep.subr.mxu0 0.0
    %88 = vmatpush1.msra.mxu0 0.0
    %89 = vmatprep.subr.mxu0 0.0
    %90 = vmatpush1.msra.mxu0 0.0
    %91 = vmatprep.subr.mxu0 0.0
    %92 = vmatpush1.msra.mxu0 0.0
    %93 = vmatprep.subr.mxu0 0.0
    %94 = vmatpush1.msra.mxu0 %v61
    %95 = vmatprep.subr.mxu0 0.0
    %96 = vmatpush2.msra.mxu0 0.0
    %97 = vmatprep.subr.mxu0 0.0
    %98 = vmatpush2.msra.mxu0 0.0
    %99 = vmatprep.subr.mxu0 0.0
    %100 = vmatpush2.msra.mxu0 0.0
    %101 = vmatprep.subr.mxu0 0.0
    %102 = vmatpush2.msra.mxu0 0.0
    %103 = vmatprep.subr.mxu0 0.0
    %104 = vmatpush2.msra.mxu0 0.0
    %105 = vmatprep.subr.mxu0 0.0
    %106 = vmatpush2.msra.mxu0 0.0
    %107 = vmatprep.subr.mxu0 0.0
    %108 = vmatpush2.msra.mxu0 0.0
    %109 = vmatprep.subr.mxu0 0.0
    %110 = vmatpush2.msra.mxu0 0.0
    %111 = vmatprep.subr.mxu0 0.0
    %112 = vmatpush2.msra.mxu0 0.0
    %113 = vmatprep.subr.mxu0 0.0
    %114 = vmatpush2.msra.mxu0 0.0
    %115 = vmatprep.subr.mxu0 0.0
    %116 = vmatpush2.msra.mxu0 0.0
    %117 = vmatprep.subr.mxu0 0.0
    %118 = vmatpush2.msra.mxu0 0.0
    %119 = vmatprep.subr.mxu0 0.0
    %120 = vmatpush2.msra.mxu0 0.0
    %121 = vmatprep.subr.mxu0 0.0
    %122 = vmatpush2.msra.mxu0 0.0
    %123 = vmatprep.subr.mxu0 0.0
    %124 = vmatpush2.msra.mxu0 0.0
    %125 = vmatprep.subr.mxu0 0.0
    %126 = vmatpush2.msra.mxu0 0.0
    %127 = vmatprep.mubr.f32.mxu0 0.0
    %128 = vmatmul.mubr.f32.gmra.mxu0 %v48
    %v129 = vpop.f32.mrf.mxu0
    %v130 = vadd.f32 0.0, %v129
    %v131 = vpop.f32.mrf.mxu0
    %132 = vmatprep.mubr.f32.mxu0 0.0
    %133 = vmatmul.mubr.f32.gmra.mxu0 %v51
    %v134 = vpop.f32.mrf.mxu0
    %v135 = vadd.f32 0.0, %v134
    %v136 = vpop.f32.mrf.mxu0
    %137 = vmatprep.mubr.f32.mxu0 0.0
    %138 = vmatmul.mubr.f32.gmra.mxu0 %v54
    %v139 = vpop.f32.mrf.mxu0
    %v140 = vadd.f32 0.0, %v139
    %v141 = vpop.f32.mrf.mxu0
    %142 = vmatprep.mubr.f32.mxu0 0.0
    %143 = vmatmul.mubr.f32.gmra.mxu0 %v57
    %v144 = vpop.f32.mrf.mxu0
    %v145 = vadd.f32 0.0, %v144
    %v146 = vpop.f32.mrf.mxu0
    %147 = vdwg.mxu0
    %v148 = vand.u32 2147483647, %v130
    %vm149 = vcmp.le.f32.partialorder %v148, 0.7853982
    %vm150 = vcmp.lt.s32.totalorder %v130, 0
    %v151 = vand.u32 %v130, 2139095040
    %v152 = vshrl.u32 %v151, 23
    %v153 = vsub.s32 %v152, 127
    %v154 = vand.u32 2147483647, %v130
    %v155 = vand.u32 %v154, 8388607
    %v156 = vor.u32 %v155, 8388608
    %v157 = vsub.s32 0, %v156
    %v158 = vadd.s32 %v153, 1
    %vm159 = vcmp.gt.s32.totalorder %v158, 0
    %v160 = vsel %vm159, %v158, 0
    %v161 = vshrl.u32 %v160, 5
    %v162 = vand.u32 %v160, 31
    %v163 = vsub.s32 32, %v162
    %v164 = vshrl.u32 683565275, %v163
    %v165 = vshll.u32 683565275, %v162
    %v166 = vshrl.u32 2475754826, %v163
    %v167 = vor.u32 %v165, %v166
    %v168 = vshll.u32 2475754826, %v162
    %v169 = vshrl.u32 2131351028, %v163
    %v170 = vor.u32 %v168, %v169
    %v171 = vshll.u32 2131351028, %v162
    %v172 = vshrl.u32 2102212464, %v163
    %v173 = vor.u32 %v171, %v172
    %v174 = vshll.u32 2102212464, %v162
    %v175 = vshrl.u32 920167782, %v163
    %v176 = vor.u32 %v174, %v175
    %v177 = vshll.u32 920167782, %v162
    %v178 = vshrl.u32 1326507024, %v163
    %v179 = vor.u32 %v177, %v178
    %vm180 = vcmp.lt.s32.totalorder %v161, 1
    %vm181 = vcmp.lt.s32.totalorder %v161, 2
    %vm182 = vcmp.lt.s32.totalorder %v161, 3
    %vm183 = vcmp.lt.s32.totalorder %v161, 4
    %v184 = vsel %vm180, %v164, %v167
    %v185 = vsel %vm183, %v173, 2102212464
    %v186 = vsel %vm182, %v170, %v185
    %v187 = vsel %vm181, %v184, %v186
    %v188 = vsel %vm180, %v167, %v170
    %v189 = vsel %vm183, %v176, 920167782
    %v190 = vsel %vm182, %v173, %v189
    %v191 = vsel %vm181, %v188, %v190
    %v192 = vsel %vm180, %v170, %v173
    %v193 = vsel %vm183, %v179, 1326507024
    %v194 = vsel %vm182, %v176, %v193
    %v195 = vsel %vm181, %v192, %v194
    %v196 = vshll.u32 %v156, 8
    %v197 = vmul.u32.u64.compose %v196, %v195
    %v198 = vextract.low.u32 %v197
    %v199 = vextract.high.u32 %v197
    %v200 = vmul.u32.u64.compose %v196, %v191
    %v201 = vextract.low.u32 %v200
    %v202 = vextract.high.u32 %v200
    %v203 = vmul.u32 %v196, %v187
    %v204 = vadd.s32 %v199, %v201
    %vm205 = vc.u32 %v199, %v201
    %v206 = vadd.s32 %v202, 1
    %v207 = vsel %vm205, %v206, %v202
    %v208 = vadd.s32 %v203, %v207
    %v209 = vadd.s32 %v208, 536870912
    %v210 = vshrl.u32 %v209, 30
    %v211 = vshll.u32 %v210, 30
    %v212 = vsub.s32 %v208, %v211
    %vm213 = vcmp.lt.s32.totalorder %v212, 0
    %v214 = vsub.s32 0, %v212
    %v215 = vsel %vm213, %v214, %v212
    %v216 = vclz %v215
    %v217 = vsub.s32 %v216, 2
    %vm218 = vcmp.gt.s32.totalorder 0, %v217
    %v219 = vsel %vm218, 0, %v217
    %v220 = vsub.s32 32, %v219
    %v221 = vshll.u32 %v212, %v219
    %v222 = vshrl.u32 %v204, %v220
    %v223 = vor.u32 %v221, %v222
    %v224 = vsub.s32 4294967266, %v219
    %v225 = vadd.s32 %v224, 127
    %v226 = vshll.u32 %v225, 23
    %v227 = vor.u32 4788187, %v226
    %v228 = vand.u32 2147483647, %v227
    %v230 = vcvt.s32.f32 %v223
    %v231 = vmul.f32 %v230, %v228
    %v232 = vxor.u32 %v231, 2147483648
    %v233 = vsel %vm150, %v232, %v231
    %v234 = vsub.s32 4, %v210
    %v235 = vsel %vm150, %v234, %v210
    %v236 = vsel %vm149, %v130, %v233
    %v237 = vsel %vm149, 0, %v235
    %v238 = vcosq.f32.pop %v236
    %v239 = vsinq.f32.pop %v236
    %vm240 = vweird.f32 %v130
    %v241 = vadd.s32 %v237, 3
    %v242 = vand.u32 %v241, 3
    %vm243 = vcmp.lt.s32.totalorder %v242, 2
    %vm244 = vcmp.eq.s32.totalorder %v242, 0
    %v245 = vxor.u32 %v239, 2147483648
    %v246 = vsel %vm244, %v238, %v245
    %vm247 = vcmp.eq.s32.totalorder %v242, 2
    %v248 = vxor.u32 %v238, 2147483648
    %v249 = vsel %vm247, %v248, %v239
    %v250 = vsel %vm243, %v246, %v249
    %v251 = vsel %vm240, nan, %v250
    %v252 = vand.u32 2147483647, %v135
    %vm253 = vcmp.le.f32.partialorder %v252, 0.7853982
    %vm254 = vcmp.lt.s32.totalorder %v135, 0
    %v255 = vand.u32 %v135, 2139095040
    %v256 = vshrl.u32 %v255, 23
    %v257 = vsub.s32 %v256, 127
    %v258 = vand.u32 2147483647, %v135
    %v259 = vand.u32 %v258, 8388607
    %v260 = vor.u32 %v259, 8388608
    %v261 = vsub.s32 0, %v260
    %v262 = vadd.s32 %v257, 1
    %vm263 = vcmp.gt.s32.totalorder %v262, 0
    %v264 = vsel %vm263, %v262, 0
    %v265 = vshrl.u32 %v264, 5
    %v266 = vand.u32 %v264, 31
    %v267 = vsub.s32 32, %v266
    %v268 = vshrl.u32 683565275, %v267
    %v269 = vshll.u32 683565275, %v266
    %v270 = vshrl.u32 2475754826, %v267
    %v271 = vor.u32 %v269, %v270
    %v272 = vshll.u32 2475754826, %v266
    %v273 = vshrl.u32 2131351028, %v267
    %v274 = vor.u32 %v272, %v273
    %v275 = vshll.u32 2131351028, %v266
    %v276 = vshrl.u32 2102212464, %v267
    %v277 = vor.u32 %v275, %v276
    %v278 = vshll.u32 2102212464, %v266
    %v279 = vshrl.u32 920167782, %v267
    %v280 = vor.u32 %v278, %v279
    %v281 = vshll.u32 920167782, %v266
    %v282 = vshrl.u32 1326507024, %v267
    %v283 = vor.u32 %v281, %v282
    %vm284 = vcmp.lt.s32.totalorder %v265, 1
    %vm285 = vcmp.lt.s32.totalorder %v265, 2
    %vm286 = vcmp.lt.s32.totalorder %v265, 3
    %vm287 = vcmp.lt.s32.totalorder %v265, 4
    %v288 = vsel %vm284, %v268, %v271
    %v289 = vsel %vm287, %v277, 2102212464
    %v290 = vsel %vm286, %v274, %v289
    %v291 = vsel %vm285, %v288, %v290
    %v292 = vsel %vm284, %v271, %v274
    %v293 = vsel %vm287, %v280, 920167782
    %v294 = vsel %vm286, %v277, %v293
    %v295 = vsel %vm285, %v292, %v294
    %v296 = vsel %vm284, %v274, %v277
    %v297 = vsel %vm287, %v283, 1326507024
    %v298 = vsel %vm286, %v280, %v297
    %v299 = vsel %vm285, %v296, %v298
    %v300 = vshll.u32 %v260, 8
    %v301 = vmul.u32.u64.compose %v300, %v299
    %v302 = vextract.low.u32 %v301
    %v303 = vextract.high.u32 %v301
    %v304 = vmul.u32.u64.compose %v300, %v295
    %v305 = vextract.low.u32 %v304
    %v306 = vextract.high.u32 %v304
    %v307 = vmul.u32 %v300, %v291
    %v308 = vadd.s32 %v303, %v305
    %vm309 = vc.u32 %v303, %v305
    %v310 = vadd.s32 %v306, 1
    %v311 = vsel %vm309, %v310, %v306
    %v312 = vadd.s32 %v307, %v311
    %v313 = vadd.s32 %v312, 536870912
    %v314 = vshrl.u32 %v313, 30
    %v315 = vshll.u32 %v314, 30
    %v316 = vsub.s32 %v312, %v315
    %vm317 = vcmp.lt.s32.totalorder %v316, 0
    %v318 = vsub.s32 0, %v316
    %v319 = vsel %vm317, %v318, %v316
    %v320 = vclz %v319
    %v321 = vsub.s32 %v320, 2
    %vm322 = vcmp.gt.s32.totalorder 0, %v321
    %v323 = vsel %vm322, 0, %v321
    %v324 = vsub.s32 32, %v323
    %v325 = vshll.u32 %v316, %v323
    %v326 = vshrl.u32 %v308, %v324
    %v327 = vor.u32 %v325, %v326
    %v328 = vsub.s32 4294967266, %v323
    %v329 = vadd.s32 %v328, 127
    %v330 = vshll.u32 %v329, 23
    %v331 = vor.u32 4788187, %v330
    %v332 = vand.u32 2147483647, %v331
    %v334 = vcvt.s32.f32 %v327
    %v335 = vmul.f32 %v334, %v332
    %v336 = vxor.u32 %v335, 2147483648
    %v337 = vsel %vm254, %v336, %v335
    %v338 = vsub.s32 4, %v314
    %v339 = vsel %vm254, %v338, %v314
    %v340 = vsel %vm253, %v135, %v337
    %v341 = vsel %vm253, 0, %v339
    %v342 = vcosq.f32.pop %v340
    %v343 = vsinq.f32.pop %v340
    %vm344 = vweird.f32 %v135
    %v345 = vadd.s32 %v341, 3
    %v346 = vand.u32 %v345, 3
    %vm347 = vcmp.lt.s32.totalorder %v346, 2
    %vm348 = vcmp.eq.s32.totalorder %v346, 0
    %v349 = vxor.u32 %v343, 2147483648
    %v350 = vsel %vm348, %v342, %v349
    %vm351 = vcmp.eq.s32.totalorder %v346, 2
    %v352 = vxor.u32 %v342, 2147483648
    %v353 = vsel %vm351, %v352, %v343
    %v354 = vsel %vm347, %v350, %v353
    %v355 = vsel %vm344, nan, %v354
    %v356 = vand.u32 2147483647, %v140
    %vm357 = vcmp.le.f32.partialorder %v356, 0.7853982
    %vm358 = vcmp.lt.s32.totalorder %v140, 0
    %v359 = vand.u32 %v140, 2139095040
    %v360 = vshrl.u32 %v359, 23
    %v361 = vsub.s32 %v360, 127
    %v362 = vand.u32 2147483647, %v140
    %v363 = vand.u32 %v362, 8388607
    %v364 = vor.u32 %v363, 8388608
    %v365 = vsub.s32 0, %v364
    %v366 = vadd.s32 %v361, 1
    %vm367 = vcmp.gt.s32.totalorder %v366, 0
    %v368 = vsel %vm367, %v366, 0
    %v369 = vshrl.u32 %v368, 5
    %v370 = vand.u32 %v368, 31
    %v371 = vsub.s32 32, %v370
    %v372 = vshrl.u32 683565275, %v371
    %v373 = vshll.u32 683565275, %v370
    %v374 = vshrl.u32 2475754826, %v371
    %v375 = vor.u32 %v373, %v374
    %v376 = vshll.u32 2475754826, %v370
    %v377 = vshrl.u32 2131351028, %v371
    %v378 = vor.u32 %v376, %v377
    %v379 = vshll.u32 2131351028, %v370
    %v380 = vshrl.u32 2102212464, %v371
    %v381 = vor.u32 %v379, %v380
    %v382 = vshll.u32 2102212464, %v370
    %v383 = vshrl.u32 920167782, %v371
    %v384 = vor.u32 %v382, %v383
    %v385 = vshll.u32 920167782, %v370
    %v386 = vshrl.u32 1326507024, %v371
    %v387 = vor.u32 %v385, %v386
    %vm388 = vcmp.lt.s32.totalorder %v369, 1
    %vm389 = vcmp.lt.s32.totalorder %v369, 2
    %vm390 = vcmp.lt.s32.totalorder %v369, 3
    %vm391 = vcmp.lt.s32.totalorder %v369, 4
    %v392 = vsel %vm388, %v372, %v375
    %v393 = vsel %vm391, %v381, 2102212464
    %v394 = vsel %vm390, %v378, %v393
    %v395 = vsel %vm389, %v392, %v394
    %v396 = vsel %vm388, %v375, %v378
    %v397 = vsel %vm391, %v384, 920167782
    %v398 = vsel %vm390, %v381, %v397
    %v399 = vsel %vm389, %v396, %v398
    %v400 = vsel %vm388, %v378, %v381
    %v401 = vsel %vm391, %v387, 1326507024
    %v402 = vsel %vm390, %v384, %v401
    %v403 = vsel %vm389, %v400, %v402
    %v404 = vshll.u32 %v364, 8
    %v405 = vmul.u32.u64.compose %v404, %v403
    %v406 = vextract.low.u32 %v405
    %v407 = vextract.high.u32 %v405
    %v408 = vmul.u32.u64.compose %v404, %v399
    %v409 = vextract.low.u32 %v408
    %v410 = vextract.high.u32 %v408
    %v411 = vmul.u32 %v404, %v395
    %v412 = vadd.s32 %v407, %v409
    %vm413 = vc.u32 %v407, %v409
    %v414 = vadd.s32 %v410, 1
    %v415 = vsel %vm413, %v414, %v410
    %v416 = vadd.s32 %v411, %v415
    %v417 = vadd.s32 %v416, 536870912
    %v418 = vshrl.u32 %v417, 30
    %v419 = vshll.u32 %v418, 30
    %v420 = vsub.s32 %v416, %v419
    %vm421 = vcmp.lt.s32.totalorder %v420, 0
    %v422 = vsub.s32 0, %v420
    %v423 = vsel %vm421, %v422, %v420
    %v424 = vclz %v423
    %v425 = vsub.s32 %v424, 2
    %vm426 = vcmp.gt.s32.totalorder 0, %v425
    %v427 = vsel %vm426, 0, %v425
    %v428 = vsub.s32 32, %v427
    %v429 = vshll.u32 %v420, %v427
    %v430 = vshrl.u32 %v412, %v428
    %v431 = vor.u32 %v429, %v430
    %v432 = vsub.s32 4294967266, %v427
    %v433 = vadd.s32 %v432, 127
    %v434 = vshll.u32 %v433, 23
    %v435 = vor.u32 4788187, %v434
    %v436 = vand.u32 2147483647, %v435
    %v438 = vcvt.s32.f32 %v431
    %v439 = vmul.f32 %v438, %v436
    %v440 = vxor.u32 %v439, 2147483648
    %v441 = vsel %vm358, %v440, %v439
    %v442 = vsub.s32 4, %v418
    %v443 = vsel %vm358, %v442, %v418
    %v444 = vsel %vm357, %v140, %v441
    %v445 = vsel %vm357, 0, %v443
    %v446 = vcosq.f32.pop %v444
    %v447 = vsinq.f32.pop %v444
    %vm448 = vweird.f32 %v140
    %v449 = vadd.s32 %v445, 3
    %v450 = vand.u32 %v449, 3
    %vm451 = vcmp.lt.s32.totalorder %v450, 2
    %vm452 = vcmp.eq.s32.totalorder %v450, 0
    %v453 = vxor.u32 %v447, 2147483648
    %v454 = vsel %vm452, %v446, %v453
    %vm455 = vcmp.eq.s32.totalorder %v450, 2
    %v456 = vxor.u32 %v446, 2147483648
    %v457 = vsel %vm455, %v456, %v447
    %v458 = vsel %vm451, %v454, %v457
    %v459 = vsel %vm448, nan, %v458
    %v460 = vand.u32 2147483647, %v145
    %vm461 = vcmp.le.f32.partialorder %v460, 0.7853982
    %vm462 = vcmp.lt.s32.totalorder %v145, 0
    %v463 = vand.u32 %v145, 2139095040
    %v464 = vshrl.u32 %v463, 23
    %v465 = vsub.s32 %v464, 127
    %v466 = vand.u32 2147483647, %v145
    %v467 = vand.u32 %v466, 8388607
    %v468 = vor.u32 %v467, 8388608
    %v469 = vsub.s32 0, %v468
    %v470 = vadd.s32 %v465, 1
    %vm471 = vcmp.gt.s32.totalorder %v470, 0
    %v472 = vsel %vm471, %v470, 0
    %v473 = vshrl.u32 %v472, 5
    %v474 = vand.u32 %v472, 31
    %v475 = vsub.s32 32, %v474
    %v476 = vshrl.u32 683565275, %v475
    %v477 = vshll.u32 683565275, %v474
    %v478 = vshrl.u32 2475754826, %v475
    %v479 = vor.u32 %v477, %v478
    %v480 = vshll.u32 2475754826, %v474
    %v481 = vshrl.u32 2131351028, %v475
    %v482 = vor.u32 %v480, %v481
    %v483 = vshll.u32 2131351028, %v474
    %v484 = vshrl.u32 2102212464, %v475
    %v485 = vor.u32 %v483, %v484
    %v486 = vshll.u32 2102212464, %v474
    %v487 = vshrl.u32 920167782, %v475
    %v488 = vor.u32 %v486, %v487
    %v489 = vshll.u32 920167782, %v474
    %v490 = vshrl.u32 1326507024, %v475
    %v491 = vor.u32 %v489, %v490
    %vm492 = vcmp.lt.s32.totalorder %v473, 1
    %vm493 = vcmp.lt.s32.totalorder %v473, 2
    %vm494 = vcmp.lt.s32.totalorder %v473, 3
    %vm495 = vcmp.lt.s32.totalorder %v473, 4
    %v496 = vsel %vm492, %v476, %v479
    %v497 = vsel %vm495, %v485, 2102212464
    %v498 = vsel %vm494, %v482, %v497
    %v499 = vsel %vm493, %v496, %v498
    %v500 = vsel %vm492, %v479, %v482
    %v501 = vsel %vm495, %v488, 920167782
    %v502 = vsel %vm494, %v485, %v501
    %v503 = vsel %vm493, %v500, %v502
    %v504 = vsel %vm492, %v482, %v485
    %v505 = vsel %vm495, %v491, 1326507024
    %v506 = vsel %vm494, %v488, %v505
    %v507 = vsel %vm493, %v504, %v506
    %v508 = vshll.u32 %v468, 8
    %v509 = vmul.u32.u64.compose %v508, %v507
    %v510 = vextract.low.u32 %v509
    %v511 = vextract.high.u32 %v509
    %v512 = vmul.u32.u64.compose %v508, %v503
    %v513 = vextract.low.u32 %v512
    %v514 = vextract.high.u32 %v512
    %v515 = vmul.u32 %v508, %v499
    %v516 = vadd.s32 %v511, %v513
    %vm517 = vc.u32 %v511, %v513
    %v518 = vadd.s32 %v514, 1
    %v519 = vsel %vm517, %v518, %v514
    %v520 = vadd.s32 %v515, %v519
    %v521 = vadd.s32 %v520, 536870912
    %v522 = vshrl.u32 %v521, 30
    %v523 = vshll.u32 %v522, 30
    %v524 = vsub.s32 %v520, %v523
    %vm525 = vcmp.lt.s32.totalorder %v524, 0
    %v526 = vsub.s32 0, %v524
    %v527 = vsel %vm525, %v526, %v524
    %v528 = vclz %v527
    %v529 = vsub.s32 %v528, 2
    %vm530 = vcmp.gt.s32.totalorder 0, %v529
    %v531 = vsel %vm530, 0, %v529
    %v532 = vsub.s32 32, %v531
    %v533 = vshll.u32 %v524, %v531
    %v534 = vshrl.u32 %v516, %v532
    %v535 = vor.u32 %v533, %v534
    %v536 = vsub.s32 4294967266, %v531
    %v537 = vadd.s32 %v536, 127
    %v538 = vshll.u32 %v537, 23
    %v539 = vor.u32 4788187, %v538
    %v540 = vand.u32 2147483647, %v539
    %v542 = vcvt.s32.f32 %v535
    %v543 = vmul.f32 %v542, %v540
    %v544 = vxor.u32 %v543, 2147483648
    %v545 = vsel %vm462, %v544, %v543
    %v546 = vsub.s32 4, %v522
    %v547 = vsel %vm462, %v546, %v522
    %v548 = vsel %vm461, %v145, %v545
    %v549 = vsel %vm461, 0, %v547
    %v550 = vcosq.f32.pop %v548
    %v551 = vsinq.f32.pop %v548
    %vm552 = vweird.f32 %v145
    %v553 = vadd.s32 %v549, 3
    %v554 = vand.u32 %v553, 3
    %vm555 = vcmp.lt.s32.totalorder %v554, 2
    %vm556 = vcmp.eq.s32.totalorder %v554, 0
    %v557 = vxor.u32 %v551, 2147483648
    %v558 = vsel %vm556, %v550, %v557
    %vm559 = vcmp.eq.s32.totalorder %v554, 2
    %v560 = vxor.u32 %v550, 2147483648
    %v561 = vsel %vm559, %v560, %v551
    %v562 = vsel %vm555, %v558, %v561
    %v563 = vsel %vm552, nan, %v562
    %v564 = vand.u32 2147483647, %v130
    %vm565 = vcmp.le.f32.partialorder %v564, 0.7853982
    %vm566 = vcmp.lt.s32.totalorder %v130, 0
    %v567 = vand.u32 %v130, 2139095040
    %v568 = vshrl.u32 %v567, 23
    %v569 = vsub.s32 %v568, 127
    %v570 = vand.u32 2147483647, %v130
    %v571 = vand.u32 %v570, 8388607
    %v572 = vor.u32 %v571, 8388608
    %v573 = vsub.s32 0, %v572
    %v574 = vadd.s32 %v569, 1
    %vm575 = vcmp.gt.s32.totalorder %v574, 0
    %v576 = vsel %vm575, %v574, 0
    %v577 = vshrl.u32 %v576, 5
    %v578 = vand.u32 %v576, 31
    %v579 = vsub.s32 32, %v578
    %v580 = vshrl.u32 683565275, %v579
    %v581 = vshll.u32 683565275, %v578
    %v582 = vshrl.u32 2475754826, %v579
    %v583 = vor.u32 %v581, %v582
    %v584 = vshll.u32 2475754826, %v578
    %v585 = vshrl.u32 2131351028, %v579
    %v586 = vor.u32 %v584, %v585
    %v587 = vshll.u32 2131351028, %v578
    %v588 = vshrl.u32 2102212464, %v579
    %v589 = vor.u32 %v587, %v588
    %v590 = vshll.u32 2102212464, %v578
    %v591 = vshrl.u32 920167782, %v579
    %v592 = vor.u32 %v590, %v591
    %v593 = vshll.u32 920167782, %v578
    %v594 = vshrl.u32 1326507024, %v579
    %v595 = vor.u32 %v593, %v594
    %vm596 = vcmp.lt.s32.totalorder %v577, 1
    %vm597 = vcmp.lt.s32.totalorder %v577, 2
    %vm598 = vcmp.lt.s32.totalorder %v577, 3
    %vm599 = vcmp.lt.s32.totalorder %v577, 4
    %v600 = vsel %vm596, %v580, %v583
    %v601 = vsel %vm599, %v589, 2102212464
    %v602 = vsel %vm598, %v586, %v601
    %v603 = vsel %vm597, %v600, %v602
    %v604 = vsel %vm596, %v583, %v586
    %v605 = vsel %vm599, %v592, 920167782
    %v606 = vsel %vm598, %v589, %v605
    %v607 = vsel %vm597, %v604, %v606
    %v608 = vsel %vm596, %v586, %v589
    %v609 = vsel %vm599, %v595, 1326507024
    %v610 = vsel %vm598, %v592, %v609
    %v611 = vsel %vm597, %v608, %v610
    %v612 = vshll.u32 %v572, 8
    %v613 = vmul.u32.u64.compose %v612, %v611
    %v614 = vextract.low.u32 %v613
    %v615 = vextract.high.u32 %v613
    %v616 = vmul.u32.u64.compose %v612, %v607
    %v617 = vextract.low.u32 %v616
    %v618 = vextract.high.u32 %v616
    %v619 = vmul.u32 %v612, %v603
    %v620 = vadd.s32 %v615, %v617
    %vm621 = vc.u32 %v615, %v617
    %v622 = vadd.s32 %v618, 1
    %v623 = vsel %vm621, %v622, %v618
    %v624 = vadd.s32 %v619, %v623
    %v625 = vadd.s32 %v624, 536870912
    %v626 = vshrl.u32 %v625, 30
    %v627 = vshll.u32 %v626, 30
    %v628 = vsub.s32 %v624, %v627
    %vm629 = vcmp.lt.s32.totalorder %v628, 0
    %v630 = vsub.s32 0, %v628
    %v631 = vsel %vm629, %v630, %v628
    %v632 = vclz %v631
    %v633 = vsub.s32 %v632, 2
    %vm634 = vcmp.gt.s32.totalorder 0, %v633
    %v635 = vsel %vm634, 0, %v633
    %v636 = vsub.s32 32, %v635
    %v637 = vshll.u32 %v628, %v635
    %v638 = vshrl.u32 %v620, %v636
    %v639 = vor.u32 %v637, %v638
    %v640 = vsub.s32 4294967266, %v635
    %v641 = vadd.s32 %v640, 127
    %v642 = vshll.u32 %v641, 23
    %v643 = vor.u32 4788187, %v642
    %v644 = vand.u32 2147483647, %v643
    %v646 = vcvt.s32.f32 %v639
    %v647 = vmul.f32 %v646, %v644
    %v648 = vxor.u32 %v647, 2147483648
    %v649 = vsel %vm566, %v648, %v647
    %v650 = vsub.s32 4, %v626
    %v651 = vsel %vm566, %v650, %v626
    %v652 = vsel %vm565, %v130, %v649
    %v653 = vsel %vm565, 0, %v651
    %v654 = vcosq.f32.pop %v652
    %v655 = vsinq.f32.pop %v652
    %vm656 = vweird.f32 %v130
    %v657 = vand.u32 %v653, 3
    %vm658 = vcmp.lt.s32.totalorder %v657, 2
    %vm659 = vcmp.eq.s32.totalorder %v657, 0
    %v660 = vxor.u32 %v655, 2147483648
    %v661 = vsel %vm659, %v654, %v660
    %vm662 = vcmp.eq.s32.totalorder %v657, 2
    %v663 = vxor.u32 %v654, 2147483648
    %v664 = vsel %vm662, %v663, %v655
    %v665 = vsel %vm658, %v661, %v664
    %v666 = vsel %vm656, nan, %v665
    %v667 = vand.u32 2147483647, %v135
    %vm668 = vcmp.le.f32.partialorder %v667, 0.7853982
    %vm669 = vcmp.lt.s32.totalorder %v135, 0
    %v670 = vand.u32 %v135, 2139095040
    %v671 = vshrl.u32 %v670, 23
    %v672 = vsub.s32 %v671, 127
    %v673 = vand.u32 2147483647, %v135
    %v674 = vand.u32 %v673, 8388607
    %v675 = vor.u32 %v674, 8388608
    %v676 = vsub.s32 0, %v675
    %v677 = vadd.s32 %v672, 1
    %vm678 = vcmp.gt.s32.totalorder %v677, 0
    %v679 = vsel %vm678, %v677, 0
    %v680 = vshrl.u32 %v679, 5
    %v681 = vand.u32 %v679, 31
    %v682 = vsub.s32 32, %v681
    %v683 = vshrl.u32 683565275, %v682
    %v684 = vshll.u32 683565275, %v681
    %v685 = vshrl.u32 2475754826, %v682
    %v686 = vor.u32 %v684, %v685
    %v687 = vshll.u32 2475754826, %v681
    %v688 = vshrl.u32 2131351028, %v682
    %v689 = vor.u32 %v687, %v688
    %v690 = vshll.u32 2131351028, %v681
    %v691 = vshrl.u32 2102212464, %v682
    %v692 = vor.u32 %v690, %v691
    %v693 = vshll.u32 2102212464, %v681
    %v694 = vshrl.u32 920167782, %v682
    %v695 = vor.u32 %v693, %v694
    %v696 = vshll.u32 920167782, %v681
    %v697 = vshrl.u32 1326507024, %v682
    %v698 = vor.u32 %v696, %v697
    %vm699 = vcmp.lt.s32.totalorder %v680, 1
    %vm700 = vcmp.lt.s32.totalorder %v680, 2
    %vm701 = vcmp.lt.s32.totalorder %v680, 3
    %vm702 = vcmp.lt.s32.totalorder %v680, 4
    %v703 = vsel %vm699, %v683, %v686
    %v704 = vsel %vm702, %v692, 2102212464
    %v705 = vsel %vm701, %v689, %v704
    %v706 = vsel %vm700, %v703, %v705
    %v707 = vsel %vm699, %v686, %v689
    %v708 = vsel %vm702, %v695, 920167782
    %v709 = vsel %vm701, %v692, %v708
    %v710 = vsel %vm700, %v707, %v709
    %v711 = vsel %vm699, %v689, %v692
    %v712 = vsel %vm702, %v698, 1326507024
    %v713 = vsel %vm701, %v695, %v712
    %v714 = vsel %vm700, %v711, %v713
    %v715 = vshll.u32 %v675, 8
    %v716 = vmul.u32.u64.compose %v715, %v714
    %v717 = vextract.low.u32 %v716
    %v718 = vextract.high.u32 %v716
    %v719 = vmul.u32.u64.compose %v715, %v710
    %v720 = vextract.low.u32 %v719
    %v721 = vextract.high.u32 %v719
    %v722 = vmul.u32 %v715, %v706
    %v723 = vadd.s32 %v718, %v720
    %vm724 = vc.u32 %v718, %v720
    %v725 = vadd.s32 %v721, 1
    %v726 = vsel %vm724, %v725, %v721
    %v727 = vadd.s32 %v722, %v726
    %v728 = vadd.s32 %v727, 536870912
    %v729 = vshrl.u32 %v728, 30
    %v730 = vshll.u32 %v729, 30
    %v731 = vsub.s32 %v727, %v730
    %vm732 = vcmp.lt.s32.totalorder %v731, 0
    %v733 = vsub.s32 0, %v731
    %v734 = vsel %vm732, %v733, %v731
    %v735 = vclz %v734
    %v736 = vsub.s32 %v735, 2
    %vm737 = vcmp.gt.s32.totalorder 0, %v736
    %v738 = vsel %vm737, 0, %v736
    %v739 = vsub.s32 32, %v738
    %v740 = vshll.u32 %v731, %v738
    %v741 = vshrl.u32 %v723, %v739
    %v742 = vor.u32 %v740, %v741
    %v743 = vsub.s32 4294967266, %v738
    %v744 = vadd.s32 %v743, 127
    %v745 = vshll.u32 %v744, 23
    %v746 = vor.u32 4788187, %v745
    %v747 = vand.u32 2147483647, %v746
    %v749 = vcvt.s32.f32 %v742
    %v750 = vmul.f32 %v749, %v747
    %v751 = vxor.u32 %v750, 2147483648
    %v752 = vsel %vm669, %v751, %v750
    %v753 = vsub.s32 4, %v729
    %v754 = vsel %vm669, %v753, %v729
    %v755 = vsel %vm668, %v135, %v752
    %v756 = vsel %vm668, 0, %v754
    %v757 = vcosq.f32.pop %v755
    %v758 = vsinq.f32.pop %v755
    %vm759 = vweird.f32 %v135
    %v760 = vand.u32 %v756, 3
    %vm761 = vcmp.lt.s32.totalorder %v760, 2
    %vm762 = vcmp.eq.s32.totalorder %v760, 0
    %v763 = vxor.u32 %v758, 2147483648
    %v764 = vsel %vm762, %v757, %v763
    %vm765 = vcmp.eq.s32.totalorder %v760, 2
    %v766 = vxor.u32 %v757, 2147483648
    %v767 = vsel %vm765, %v766, %v758
    %v768 = vsel %vm761, %v764, %v767
    %v769 = vsel %vm759, nan, %v768
    %v770 = vand.u32 2147483647, %v140
    %vm771 = vcmp.le.f32.partialorder %v770, 0.7853982
    %vm772 = vcmp.lt.s32.totalorder %v140, 0
    %v773 = vand.u32 %v140, 2139095040
    %v774 = vshrl.u32 %v773, 23
    %v775 = vsub.s32 %v774, 127
    %v776 = vand.u32 2147483647, %v140
    %v777 = vand.u32 %v776, 8388607
    %v778 = vor.u32 %v777, 8388608
    %v779 = vsub.s32 0, %v778
    %v780 = vadd.s32 %v775, 1
    %vm781 = vcmp.gt.s32.totalorder %v780, 0
    %v782 = vsel %vm781, %v780, 0
    %v783 = vshrl.u32 %v782, 5
    %v784 = vand.u32 %v782, 31
    %v785 = vsub.s32 32, %v784
    %v786 = vshrl.u32 683565275, %v785
    %v787 = vshll.u32 683565275, %v784
    %v788 = vshrl.u32 2475754826, %v785
    %v789 = vor.u32 %v787, %v788
    %v790 = vshll.u32 2475754826, %v784
    %v791 = vshrl.u32 2131351028, %v785
    %v792 = vor.u32 %v790, %v791
    %v793 = vshll.u32 2131351028, %v784
    %v794 = vshrl.u32 2102212464, %v785
    %v795 = vor.u32 %v793, %v794
    %v796 = vshll.u32 2102212464, %v784
    %v797 = vshrl.u32 920167782, %v785
    %v798 = vor.u32 %v796, %v797
    %v799 = vshll.u32 920167782, %v784
    %v800 = vshrl.u32 1326507024, %v785
    %v801 = vor.u32 %v799, %v800
    %vm802 = vcmp.lt.s32.totalorder %v783, 1
    %vm803 = vcmp.lt.s32.totalorder %v783, 2
    %vm804 = vcmp.lt.s32.totalorder %v783, 3
    %vm805 = vcmp.lt.s32.totalorder %v783, 4
    %v806 = vsel %vm802, %v786, %v789
    %v807 = vsel %vm805, %v795, 2102212464
    %v808 = vsel %vm804, %v792, %v807
    %v809 = vsel %vm803, %v806, %v808
    %v810 = vsel %vm802, %v789, %v792
    %v811 = vsel %vm805, %v798, 920167782
    %v812 = vsel %vm804, %v795, %v811
    %v813 = vsel %vm803, %v810, %v812
    %v814 = vsel %vm802, %v792, %v795
    %v815 = vsel %vm805, %v801, 1326507024
    %v816 = vsel %vm804, %v798, %v815
    %v817 = vsel %vm803, %v814, %v816
    %v818 = vshll.u32 %v778, 8
    %v819 = vmul.u32.u64.compose %v818, %v817
    %v820 = vextract.low.u32 %v819
    %v821 = vextract.high.u32 %v819
    %v822 = vmul.u32.u64.compose %v818, %v813
    %v823 = vextract.low.u32 %v822
    %v824 = vextract.high.u32 %v822
    %v825 = vmul.u32 %v818, %v809
    %v826 = vadd.s32 %v821, %v823
    %vm827 = vc.u32 %v821, %v823
    %v828 = vadd.s32 %v824, 1
    %v829 = vsel %vm827, %v828, %v824
    %v830 = vadd.s32 %v825, %v829
    %v831 = vadd.s32 %v830, 536870912
    %v832 = vshrl.u32 %v831, 30
    %v833 = vshll.u32 %v832, 30
    %v834 = vsub.s32 %v830, %v833
    %vm835 = vcmp.lt.s32.totalorder %v834, 0
    %v836 = vsub.s32 0, %v834
    %v837 = vsel %vm835, %v836, %v834
    %v838 = vclz %v837
    %v839 = vsub.s32 %v838, 2
    %vm840 = vcmp.gt.s32.totalorder 0, %v839
    %v841 = vsel %vm840, 0, %v839
    %v842 = vsub.s32 32, %v841
    %v843 = vshll.u32 %v834, %v841
    %v844 = vshrl.u32 %v826, %v842
    %v845 = vor.u32 %v843, %v844
    %v846 = vsub.s32 4294967266, %v841
    %v847 = vadd.s32 %v846, 127
    %v848 = vshll.u32 %v847, 23
    %v849 = vor.u32 4788187, %v848
    %v850 = vand.u32 2147483647, %v849
    %v852 = vcvt.s32.f32 %v845
    %v853 = vmul.f32 %v852, %v850
    %v854 = vxor.u32 %v853, 2147483648
    %v855 = vsel %vm772, %v854, %v853
    %v856 = vsub.s32 4, %v832
    %v857 = vsel %vm772, %v856, %v832
    %v858 = vsel %vm771, %v140, %v855
    %v859 = vsel %vm771, 0, %v857
    %v860 = vcosq.f32.pop %v858
    %v861 = vsinq.f32.pop %v858
    %vm862 = vweird.f32 %v140
    %v863 = vand.u32 %v859, 3
    %vm864 = vcmp.lt.s32.totalorder %v863, 2
    %vm865 = vcmp.eq.s32.totalorder %v863, 0
    %v866 = vxor.u32 %v861, 2147483648
    %v867 = vsel %vm865, %v860, %v866
    %vm868 = vcmp.eq.s32.totalorder %v863, 2
    %v869 = vxor.u32 %v860, 2147483648
    %v870 = vsel %vm868, %v869, %v861
    %v871 = vsel %vm864, %v867, %v870
    %v872 = vsel %vm862, nan, %v871
    %v873 = vand.u32 2147483647, %v145
    %vm874 = vcmp.le.f32.partialorder %v873, 0.7853982
    %vm875 = vcmp.lt.s32.totalorder %v145, 0
    %v876 = vand.u32 %v145, 2139095040
    %v877 = vshrl.u32 %v876, 23
    %v878 = vsub.s32 %v877, 127
    %v879 = vand.u32 2147483647, %v145
    %v880 = vand.u32 %v879, 8388607
    %v881 = vor.u32 %v880, 8388608
    %v882 = vsub.s32 0, %v881
    %v883 = vadd.s32 %v878, 1
    %vm884 = vcmp.gt.s32.totalorder %v883, 0
    %v885 = vsel %vm884, %v883, 0
    %v886 = vshrl.u32 %v885, 5
    %v887 = vand.u32 %v885, 31
    %v888 = vsub.s32 32, %v887
    %v889 = vshrl.u32 683565275, %v888
    %v890 = vshll.u32 683565275, %v887
    %v891 = vshrl.u32 2475754826, %v888
    %v892 = vor.u32 %v890, %v891
    %v893 = vshll.u32 2475754826, %v887
    %v894 = vshrl.u32 2131351028, %v888
    %v895 = vor.u32 %v893, %v894
    %v896 = vshll.u32 2131351028, %v887
    %v897 = vshrl.u32 2102212464, %v888
    %v898 = vor.u32 %v896, %v897
    %v899 = vshll.u32 2102212464, %v887
    %v900 = vshrl.u32 920167782, %v888
    %v901 = vor.u32 %v899, %v900
    %v902 = vshll.u32 920167782, %v887
    %v903 = vshrl.u32 1326507024, %v888
    %v904 = vor.u32 %v902, %v903
    %vm905 = vcmp.lt.s32.totalorder %v886, 1
    %vm906 = vcmp.lt.s32.totalorder %v886, 2
    %vm907 = vcmp.lt.s32.totalorder %v886, 3
    %vm908 = vcmp.lt.s32.totalorder %v886, 4
    %v909 = vsel %vm905, %v889, %v892
    %v910 = vsel %vm908, %v898, 2102212464
    %v911 = vsel %vm907, %v895, %v910
    %v912 = vsel %vm906, %v909, %v911
    %v913 = vsel %vm905, %v892, %v895
    %v914 = vsel %vm908, %v901, 920167782
    %v915 = vsel %vm907, %v898, %v914
    %v916 = vsel %vm906, %v913, %v915
    %v917 = vsel %vm905, %v895, %v898
    %v918 = vsel %vm908, %v904, 1326507024
    %v919 = vsel %vm907, %v901, %v918
    %v920 = vsel %vm906, %v917, %v919
    %v921 = vshll.u32 %v881, 8
    %v922 = vmul.u32.u64.compose %v921, %v920
    %v923 = vextract.low.u32 %v922
    %v924 = vextract.high.u32 %v922
    %v925 = vmul.u32.u64.compose %v921, %v916
    %v926 = vextract.low.u32 %v925
    %v927 = vextract.high.u32 %v925
    %v928 = vmul.u32 %v921, %v912
    %v929 = vadd.s32 %v924, %v926
    %vm930 = vc.u32 %v924, %v926
    %v931 = vadd.s32 %v927, 1
    %v932 = vsel %vm930, %v931, %v927
    %v933 = vadd.s32 %v928, %v932
    %v934 = vadd.s32 %v933, 536870912
    %v935 = vshrl.u32 %v934, 30
    %v936 = vshll.u32 %v935, 30
    %v937 = vsub.s32 %v933, %v936
    %vm938 = vcmp.lt.s32.totalorder %v937, 0
    %v939 = vsub.s32 0, %v937
    %v940 = vsel %vm938, %v939, %v937
    %v941 = vclz %v940
    %v942 = vsub.s32 %v941, 2
    %vm943 = vcmp.gt.s32.totalorder 0, %v942
    %v944 = vsel %vm943, 0, %v942
    %v945 = vsub.s32 32, %v944
    %v946 = vshll.u32 %v937, %v944
    %v947 = vshrl.u32 %v929, %v945
    %v948 = vor.u32 %v946, %v947
    %v949 = vsub.s32 4294967266, %v944
    %v950 = vadd.s32 %v949, 127
    %v951 = vshll.u32 %v950, 23
    %v952 = vor.u32 4788187, %v951
    %v953 = vand.u32 2147483647, %v952
    %v955 = vcvt.s32.f32 %v948
    %v956 = vmul.f32 %v955, %v953
    %v957 = vxor.u32 %v956, 2147483648
    %v958 = vsel %vm875, %v957, %v956
    %v959 = vsub.s32 4, %v935
    %v960 = vsel %vm875, %v959, %v935
    %v961 = vsel %vm874, %v145, %v958
    %v962 = vsel %vm874, 0, %v960
    %v963 = vcosq.f32.pop %v961
    %v964 = vsinq.f32.pop %v961
    %vm965 = vweird.f32 %v145
    %v966 = vand.u32 %v962, 3
    %vm967 = vcmp.lt.s32.totalorder %v966, 2
    %vm968 = vcmp.eq.s32.totalorder %v966, 0
    %v969 = vxor.u32 %v964, 2147483648
    %v970 = vsel %vm968, %v963, %v969
    %vm971 = vcmp.eq.s32.totalorder %v966, 2
    %v972 = vxor.u32 %v963, 2147483648
    %v973 = vsel %vm971, %v972, %v964
    %v974 = vsel %vm967, %v970, %v973
    %v975 = vsel %vm965, nan, %v974
    %980 = vrot.lane.b32.xlu0 %v251, 3
    %v981 = vpop.permute.xlu0 %980
    %982 = vrot.lane.b32.xlu0 %v355, 3
    %v983 = vpop.permute.xlu0 %982
    %984 = vrot.lane.b32.xlu0 %v459, 3
    %v985 = vpop.permute.xlu0 %984
    %986 = vrot.lane.b32.xlu0 %v563, 3
    %v987 = vpop.permute.xlu0 %986
    %996 = vrot.lane.b32.xlu0 %v666, 19
    %v997 = vpop.permute.xlu0 %996
    %998 = vrot.lane.b32.xlu0 %v769, 19
    %v999 = vpop.permute.xlu0 %998
    %1000 = vrot.lane.b32.xlu0 %v872, 19
    %v1001 = vpop.permute.xlu0 %1000
    %1002 = vrot.lane.b32.xlu0 %v975, 19
    %v1003 = vpop.permute.xlu0 %1002
    %v1008 = vsel %vm46, %v41, %v981
    %v1009 = vsel %vm46, %v42, %v983
    %v1010 = vsel %vm46, %v43, %v985
    %v1011 = vsel %vm46, %v44, %v987
    %vm1012 = vcmask 154624
    %v1013 = vsel %vm1012, %v1008, %v997
    %v1014 = vsel %vm1012, %v1009, %v999
    %v1015 = vsel %vm1012, %v1010, %v1001
    %v1016 = vsel %vm1012, %v1011, %v1003
    %v1017 = vpack.c.bf16 %v1014, %v1013
    %v1018 = vpack.c.bf16 %v1016, %v1015
    %vm1019 = vcmp.gt.f32.partialorder %v1013, 0.0
    %vm1020 = vcmp.gt.f32.partialorder %v1014, 0.0
    %vm1021 = vcmp.gt.f32.partialorder %v1015, 0.0
    %vm1022 = vcmp.gt.f32.partialorder %v1016, 0.0
    %v1023 = vmul.f32 %v1013, 0.01
    %v1024 = vmul.f32 %v1014, 0.01
    %v1025 = vmul.f32 %v1015, 0.01
    %v1026 = vmul.f32 %v1016, 0.01
    %v1027 = vsel %vm1019, %v1013, %v1023
    %v1028 = vsel %vm1020, %v1014, %v1024
    %v1029 = vsel %vm1021, %v1015, %v1025
    %v1030 = vsel %vm1022, %v1016, %v1026
    %v1031 = vpack.c.bf16 %v1028, %v1027
    %v1032 = vpack.c.bf16 %v1030, %v1029
    %v1033 = vld [vmem:[%s3] sm:$0xf]
    %v1034 = vld [vmem:[%s3 + $0x4] sm:$0xf]
    %v1035 = vld [vmem:[%s3 + $0x8] sm:$0xf]
    %v1036 = vld [vmem:[%s3 + $0xc] sm:$0xf]
    %v1037 = vld [vmem:[%s3 + $0x10] sm:$0x3]
    %v1038 = vld [vmem:[%s4] sm:$0x1]
    %v1039 = vlaneseq
    %v1040 = vshrl.u32 %v1039, 7
    %v1041 = vsub.s32 0, %v1040
    %v1042 = vrot.slane %v1038, %v1041
    %v1048 = vunpack.c.l.b16 %v1033
    %v1049 = vunpack.c.l.b16 %v1034
    %v1050 = vunpack.c.l.b16 %v1035
    %v1051 = vunpack.c.l.b16 %v1036
    %v1052 = vunpack.c.l.b16 %v1037
    %v1053 = vpack.c.b16 %v1049, %v1048
    %v1054 = vpack.c.b16 %v1051, %v1050
    %v1055 = vpack.c.b16 %v1052, %v1052
    %vm1058 = vcmask 285696
    %v1060 = vsel %vm1058, %v1017, 0
    %v1063 = vsel %vm1058, %v1018, 0
    %vm1065 = vcmask 1040384
    %vm1066 = vcmask 1041408
    %v1067 = vsel %vm1065, 4294967295, 65535
    %v1068 = vsel %vm1066, %v1067, 0
    %v1070 = vand.u32 %v1055, %v1068
    %1072 = vmatprep.subr.bf16.mxu0 0
    %1073 = vmatpush1.bf16.msra.mxu0 0
    %1074 = vmatprep.subr.bf16.mxu0 0
    %1075 = vmatpush1.bf16.msra.mxu0 0
    %1076 = vmatprep.subr.bf16.mxu0 0
    %1077 = vmatpush1.bf16.msra.mxu0 0
    %1078 = vmatprep.subr.bf16.mxu0 0
    %1079 = vmatpush1.bf16.msra.mxu0 0
    %1080 = vmatprep.subr.bf16.mxu0 0
    %1081 = vmatpush1.bf16.msra.mxu0 0
    %1082 = vmatprep.subr.bf16.mxu0 0
    %1083 = vmatpush1.bf16.msra.mxu0 %v1070
    %1084 = vmatprep.subr.bf16.mxu0 0
    %1085 = vmatpush1.bf16.msra.mxu0 %v1054
    %1086 = vmatprep.subr.bf16.mxu0 0
    %1087 = vmatpush1.bf16.msra.mxu0 %v1053
    %1088 = vmatprep.subr.bf16.mxu0 0
    %1089 = vmatpush2.bf16.msra.mxu0 0
    %1090 = vmatprep.subr.bf16.mxu0 0
    %1091 = vmatpush2.bf16.msra.mxu0 0
    %1092 = vmatprep.subr.bf16.mxu0 0
    %1093 = vmatpush2.bf16.msra.mxu0 0
    %1094 = vmatprep.subr.bf16.mxu0 0
    %1095 = vmatpush2.bf16.msra.mxu0 0
    %1096 = vmatprep.subr.bf16.mxu0 0
    %1097 = vmatpush2.bf16.msra.mxu0 0
    %1098 = vmatprep.subr.bf16.mxu0 0
    %1099 = vmatpush2.bf16.msra.mxu0 0
    %1100 = vmatprep.subr.bf16.mxu0 0
    %1101 = vmatpush2.bf16.msra.mxu0 0
    %1102 = vmatprep.subr.bf16.mxu0 0
    %1103 = vmatpush2.bf16.msra.mxu0 0
    %1104 = vmatprep.mubr.bf16.mxu0 0
    %1105 = vmatmul.mubr.bf16.gmra.mxu0 %v1060
    %v1106 = vpop.f32.mrf.mxu0
    %v1107 = vadd.f32 %v1042, %v1106
    %v1108 = vpop.f32.mrf.mxu0
    %v1109 = vpop.f32.mrf.mxu0
    %v1110 = vadd.f32 %v1042, %v1109
    %v1111 = vpop.f32.mrf.mxu0
    %1112 = vmatprep.mubr.bf16.mxu0 0
    %1113 = vmatmul.mubr.bf16.gmra.mxu0 %v1063
    %v1114 = vpop.f32.mrf.mxu0
    %v1115 = vadd.f32 %v1042, %v1114
    %v1116 = vpop.f32.mrf.mxu0
    %v1117 = vpop.f32.mrf.mxu0
    %v1118 = vadd.f32 %v1042, %v1117
    %v1119 = vpop.f32.mrf.mxu0
    %1120 = vdwg.mxu0
    %vm1121 = vcmp.gt.f32.partialorder %v1107, 0.0
    %vm1122 = vcmp.gt.f32.partialorder %v1110, 0.0
    %vm1123 = vcmp.gt.f32.partialorder %v1115, 0.0
    %vm1124 = vcmp.gt.f32.partialorder %v1118, 0.0
    %v1125 = vmul.f32 %v1107, 0.01
    %v1126 = vmul.f32 %v1110, 0.01
    %v1127 = vmul.f32 %v1115, 0.01
    %v1128 = vmul.f32 %v1118, 0.01
    %v1129 = vsel %vm1121, %v1107, %v1125
    %v1130 = vsel %vm1122, %v1110, %v1126
    %v1131 = vsel %vm1123, %v1115, %v1127
    %v1132 = vsel %vm1124, %v1118, %v1128
    %v1133 = vpack.c.bf16 %v1130, %v1129
    %v1134 = vpack.c.bf16 %v1132, %v1131
    %v1135 = vld [vmem:[#allocation2] sm:$0xf]
    %v1136 = vld [vmem:[#allocation2 + $0x4] sm:$0xf]
    %v1137 = vld [vmem:[#allocation2 + $0x8] sm:$0xf]
    %v1138 = vld [vmem:[#allocation2 + $0xc] sm:$0xf]
    %v1139 = vld [vmem:[#allocation2 + $0x10] sm:$0xf]
    %v1140 = vld [vmem:[#allocation2 + $0x14] sm:$0xf]
    %v1141 = vld [vmem:[#allocation2 + $0x18] sm:$0xf]
    %v1142 = vld [vmem:[#allocation2 + $0x1c] sm:$0xf]
    %s1143 = scalar_lea.vmem %s3, 20
    %v1144 = vld [vmem:[%s1143] sm:$0xf]
    %v1145 = vld [vmem:[%s1143 + $0x4] sm:$0xf]
    %v1146 = vld [vmem:[%s1143 + $0x8] sm:$0xf]
    %v1147 = vld [vmem:[%s1143 + $0xc] sm:$0xf]
    %v1148 = vld [vmem:[%s1143 + $0x10] sm:$0x3]
    %v1154 = vunpack.c.l.b16 %v1144
    %v1155 = vunpack.c.l.b16 %v1145
    %v1156 = vunpack.c.l.b16 %v1146
    %v1157 = vunpack.c.l.b16 %v1147
    %v1158 = vunpack.c.l.b16 %v1148
    %v1159 = vpack.c.b16 %v1155, %v1154
    %v1160 = vpack.c.b16 %v1157, %v1156
    %v1161 = vpack.c.b16 %v1158, %v1158
    %v1165 = vsel %vm1058, %v1031, 0
    %v1168 = vsel %vm1058, %v1032, 0
    %v1171 = vand.u32 %v1161, %v1068
    %1173 = vmatprep.subr.bf16.mxu0 0
    %1174 = vmatpush1.bf16.msra.mxu0 0
    %1175 = vmatprep.subr.bf16.mxu0 0
    %1176 = vmatpush1.bf16.msra.mxu0 0
    %1177 = vmatprep.subr.bf16.mxu0 0
    %1178 = vmatpush1.bf16.msra.mxu0 0
    %1179 = vmatprep.subr.bf16.mxu0 0
    %1180 = vmatpush1.bf16.msra.mxu0 0
    %1181 = vmatprep.subr.bf16.mxu0 0
    %1182 = vmatpush1.bf16.msra.mxu0 0
    %1183 = vmatprep.subr.bf16.mxu0 0
    %1184 = vmatpush1.bf16.msra.mxu0 %v1171
    %1185 = vmatprep.subr.bf16.mxu0 0
    %1186 = vmatpush1.bf16.msra.mxu0 %v1160
    %1187 = vmatprep.subr.bf16.mxu0 0
    %1188 = vmatpush1.bf16.msra.mxu0 %v1159
    %1189 = vmatprep.subr.bf16.mxu0 0
    %1190 = vmatpush2.bf16.msra.mxu0 0
    %1191 = vmatprep.subr.bf16.mxu0 0
    %1192 = vmatpush2.bf16.msra.mxu0 0
    %1193 = vmatprep.subr.bf16.mxu0 0
    %1194 = vmatpush2.bf16.msra.mxu0 0
    %1195 = vmatprep.subr.bf16.mxu0 0
    %1196 = vmatpush2.bf16.msra.mxu0 0
    %1197 = vmatprep.subr.bf16.mxu0 0
    %1198 = vmatpush2.bf16.msra.mxu0 0
    %1199 = vmatprep.subr.bf16.mxu0 0
    %1200 = vmatpush2.bf16.msra.mxu0 0
    %1201 = vmatprep.subr.bf16.mxu0 0
    %1202 = vmatpush2.bf16.msra.mxu0 0
    %1203 = vmatprep.subr.bf16.mxu0 0
    %1204 = vmatpush2.bf16.msra.mxu0 0
    %1205 = vmatprep.mubr.bf16.mxu0 0
    %1206 = vmatmul.mubr.bf16.gmra.mxu0 %v1165
    %v1207 = vpop.f32.mrf.mxu0
    %v1208 = vadd.f32 0.0, %v1207
    %v1209 = vpop.f32.mrf.mxu0
    %v1210 = vpop.f32.mrf.mxu0
    %v1211 = vadd.f32 0.0, %v1210
    %v1212 = vpop.f32.mrf.mxu0
    %1213 = vmatprep.mubr.bf16.mxu0 0
    %1214 = vmatmul.mubr.bf16.gmra.mxu0 %v1168
    %v1215 = vpop.f32.mrf.mxu0
    %v1216 = vadd.f32 0.0, %v1215
    %v1217 = vpop.f32.mrf.mxu0
    %v1218 = vpop.f32.mrf.mxu0
    %v1219 = vadd.f32 0.0, %v1218
    %v1220 = vpop.f32.mrf.mxu0
    %1221 = vdwg.mxu0
    %v1230 = vunpack.c.l.b16 %v1135
    %v1231 = vunpack.c.l.b16 %v1136
    %v1232 = vunpack.c.l.b16 %v1137
    %v1233 = vunpack.c.l.b16 %v1138
    %v1234 = vunpack.c.l.b16 %v1139
    %v1235 = vunpack.c.l.b16 %v1140
    %v1236 = vunpack.c.l.b16 %v1141
    %v1237 = vunpack.c.l.b16 %v1142
    %v1238 = vpack.c.b16 %v1231, %v1230
    %v1239 = vpack.c.b16 %v1233, %v1232
    %v1240 = vpack.c.b16 %v1235, %v1234
    %v1241 = vpack.c.b16 %v1237, %v1236
    %vm1246 = vcmask 523264
    %v1248 = vsel %vm1246, %v1133, 0
    %v1251 = vsel %vm1246, %v1134, 0
    %1253 = vmatprep.subr.bf16.mxu0 0
    %1254 = vmatpush1.bf16.msra.mxu0 0
    %1255 = vmatprep.subr.bf16.mxu0 0
    %1256 = vmatpush1.bf16.msra.mxu0 0
    %1257 = vmatprep.subr.bf16.mxu0 0
    %1258 = vmatpush1.bf16.msra.mxu0 0
    %1259 = vmatprep.subr.bf16.mxu0 0
    %1260 = vmatpush1.bf16.msra.mxu0 0
    %1261 = vmatprep.subr.bf16.mxu0 0
    %1262 = vmatpush1.bf16.msra.mxu0 %v1241
    %1263 = vmatprep.subr.bf16.mxu0 0
    %1264 = vmatpush1.bf16.msra.mxu0 %v1240
    %1265 = vmatprep.subr.bf16.mxu0 0
    %1266 = vmatpush1.bf16.msra.mxu0 %v1239
    %1267 = vmatprep.subr.bf16.mxu0 0
    %1268 = vmatpush1.bf16.msra.mxu0 %v1238
    %1269 = vmatprep.subr.bf16.mxu0 0
    %1270 = vmatpush2.bf16.msra.mxu0 0
    %1271 = vmatprep.subr.bf16.mxu0 0
    %1272 = vmatpush2.bf16.msra.mxu0 0
    %1273 = vmatprep.subr.bf16.mxu0 0
    %1274 = vmatpush2.bf16.msra.mxu0 0
    %1275 = vmatprep.subr.bf16.mxu0 0
    %1276 = vmatpush2.bf16.msra.mxu0 0
    %1277 = vmatprep.subr.bf16.mxu0 0
    %1278 = vmatpush2.bf16.msra.mxu0 0
    %1279 = vmatprep.subr.bf16.mxu0 0
    %1280 = vmatpush2.bf16.msra.mxu0 0
    %1281 = vmatprep.subr.bf16.mxu0 0
    %1282 = vmatpush2.bf16.msra.mxu0 0
    %1283 = vmatprep.subr.bf16.mxu0 0
    %1284 = vmatpush2.bf16.msra.mxu0 0
    %1285 = vmatprep.mubr.bf16.mxu0 0
    %1286 = vmatmul.mubr.bf16.gmra.mxu0 %v1248
    %v1287 = vpop.f32.mrf.mxu0
    %v1288 = vadd.f32 %v1208, %v1287
    %v1289 = vpop.f32.mrf.mxu0
    %v1290 = vpop.f32.mrf.mxu0
    %v1291 = vadd.f32 %v1211, %v1290
    %v1292 = vpop.f32.mrf.mxu0
    %1293 = vmatprep.mubr.bf16.mxu0 0
    %1294 = vmatmul.mubr.bf16.gmra.mxu0 %v1251
    %v1295 = vpop.f32.mrf.mxu0
    %v1296 = vadd.f32 %v1216, %v1295
    %v1297 = vpop.f32.mrf.mxu0
    %v1298 = vpop.f32.mrf.mxu0
    %v1299 = vadd.f32 %v1219, %v1298
    %v1300 = vpop.f32.mrf.mxu0
    %1301 = vdwg.mxu0
    %v1302 = vld [vmem:[%s4 + $0x1] sm:$0x1]
    %v1303 = vlaneseq
    %v1304 = vshrl.u32 %v1303, 7
    %v1305 = vsub.s32 0, %v1304
    %v1306 = vrot.slane %v1302, %v1305
    %v1307 = vadd.f32 %v1288, %v1306
    %v1308 = vadd.f32 %v1291, %v1306
    %v1309 = vadd.f32 %v1296, %v1306
    %v1310 = vadd.f32 %v1299, %v1306
    %vm1311 = vcmp.gt.f32.partialorder %v1307, 0.0
    %vm1312 = vcmp.gt.f32.partialorder %v1308, 0.0
    %vm1313 = vcmp.gt.f32.partialorder %v1309, 0.0
    %vm1314 = vcmp.gt.f32.partialorder %v1310, 0.0
    %v1315 = vmul.f32 %v1307, 0.01
    %v1316 = vmul.f32 %v1308, 0.01
    %v1317 = vmul.f32 %v1309, 0.01
    %v1318 = vmul.f32 %v1310, 0.01
    %v1319 = vsel %vm1311, %v1307, %v1315
    %v1320 = vsel %vm1312, %v1308, %v1316
    %v1321 = vsel %vm1313, %v1309, %v1317
    %v1322 = vsel %vm1314, %v1310, %v1318
    %v1323 = vpack.c.bf16 %v1320, %v1319
    %v1324 = vpack.c.bf16 %v1322, %v1321
    %s1325 = scalar_lea.vmem [#allocation2], 32
    %v1326 = vld [vmem:[%s1325] sm:$0xf]
    %v1327 = vld [vmem:[%s1325 + $0x4] sm:$0xf]
    %v1328 = vld [vmem:[%s1325 + $0x8] sm:$0xf]
    %v1329 = vld [vmem:[%s1325 + $0xc] sm:$0xf]
    %v1330 = vld [vmem:[%s1325 + $0x10] sm:$0xf]
    %v1331 = vld [vmem:[%s1325 + $0x14] sm:$0xf]
    %v1332 = vld [vmem:[%s1325 + $0x18] sm:$0xf]
    %v1333 = vld [vmem:[%s1325 + $0x1c] sm:$0xf]
    %v1334 = vld [vmem:[%s4 + $0x2] sm:$0x1]
    %v1335 = vlaneseq
    %v1336 = vshrl.u32 %v1335, 7
    %v1337 = vsub.s32 0, %v1336
    %v1338 = vrot.slane %v1334, %v1337
    %v1347 = vunpack.c.l.b16 %v1326
    %v1348 = vunpack.c.l.b16 %v1327
    %v1349 = vunpack.c.l.b16 %v1328
    %v1350 = vunpack.c.l.b16 %v1329
    %v1351 = vunpack.c.l.b16 %v1330
    %v1352 = vunpack.c.l.b16 %v1331
    %v1353 = vunpack.c.l.b16 %v1332
    %v1354 = vunpack.c.l.b16 %v1333
    %v1355 = vpack.c.b16 %v1348, %v1347
    %v1356 = vpack.c.b16 %v1350, %v1349
    %v1357 = vpack.c.b16 %v1352, %v1351
    %v1358 = vpack.c.b16 %v1354, %v1353
    %v1364 = vsel %vm1246, %v1323, 0
    %v1367 = vsel %vm1246, %v1324, 0
    %1369 = vmatprep.subr.bf16.mxu0 0
    %1370 = vmatpush1.bf16.msra.mxu0 0
    %1371 = vmatprep.subr.bf16.mxu0 0
    %1372 = vmatpush1.bf16.msra.mxu0 0
    %1373 = vmatprep.subr.bf16.mxu0 0
    %1374 = vmatpush1.bf16.msra.mxu0 0
    %1375 = vmatprep.subr.bf16.mxu0 0
    %1376 = vmatpush1.bf16.msra.mxu0 0
    %1377 = vmatprep.subr.bf16.mxu0 0
    %1378 = vmatpush1.bf16.msra.mxu0 %v1358
    %1379 = vmatprep.subr.bf16.mxu0 0
    %1380 = vmatpush1.bf16.msra.mxu0 %v1357
    %1381 = vmatprep.subr.bf16.mxu0 0
    %1382 = vmatpush1.bf16.msra.mxu0 %v1356
    %1383 = vmatprep.subr.bf16.mxu0 0
    %1384 = vmatpush1.bf16.msra.mxu0 %v1355
    %1385 = vmatprep.subr.bf16.mxu0 0
    %1386 = vmatpush2.bf16.msra.mxu0 0
    %1387 = vmatprep.subr.bf16.mxu0 0
    %1388 = vmatpush2.bf16.msra.mxu0 0
    %1389 = vmatprep.subr.bf16.mxu0 0
    %1390 = vmatpush2.bf16.msra.mxu0 0
    %1391 = vmatprep.subr.bf16.mxu0 0
    %1392 = vmatpush2.bf16.msra.mxu0 0
    %1393 = vmatprep.subr.bf16.mxu0 0
    %1394 = vmatpush2.bf16.msra.mxu0 0
    %1395 = vmatprep.subr.bf16.mxu0 0
    %1396 = vmatpush2.bf16.msra.mxu0 0
    %1397 = vmatprep.subr.bf16.mxu0 0
    %1398 = vmatpush2.bf16.msra.mxu0 0
    %1399 = vmatprep.subr.bf16.mxu0 0
    %1400 = vmatpush2.bf16.msra.mxu0 0
    %1401 = vmatprep.mubr.bf16.mxu0 0
    %1402 = vmatmul.mubr.bf16.gmra.mxu0 %v1364
    %v1403 = vpop.f32.mrf.mxu0
    %v1404 = vadd.f32 %v1338, %v1403
    %v1405 = vpop.f32.mrf.mxu0
    %v1406 = vpop.f32.mrf.mxu0
    %v1407 = vadd.f32 %v1338, %v1406
    %v1408 = vpop.f32.mrf.mxu0
    %1409 = vmatprep.mubr.bf16.mxu0 0
    %1410 = vmatmul.mubr.bf16.gmra.mxu0 %v1367
    %v1411 = vpop.f32.mrf.mxu0
    %v1412 = vadd.f32 %v1338, %v1411
    %v1413 = vpop.f32.mrf.mxu0
    %v1414 = vpop.f32.mrf.mxu0
    %v1415 = vadd.f32 %v1338, %v1414
    %v1416 = vpop.f32.mrf.mxu0
    %1417 = vdwg.mxu0
    %vm1418 = vcmp.gt.f32.partialorder %v1404, 0.0
    %vm1419 = vcmp.gt.f32.partialorder %v1407, 0.0
    %vm1420 = vcmp.gt.f32.partialorder %v1412, 0.0
    %vm1421 = vcmp.gt.f32.partialorder %v1415, 0.0
    %v1422 = vmul.f32 %v1404, 0.01
    %v1423 = vmul.f32 %v1407, 0.01
    %v1424 = vmul.f32 %v1412, 0.01
    %v1425 = vmul.f32 %v1415, 0.01
    %v1426 = vsel %vm1418, %v1404, %v1422
    %v1427 = vsel %vm1419, %v1407, %v1423
    %v1428 = vsel %vm1420, %v1412, %v1424
    %v1429 = vsel %vm1421, %v1415, %v1425
    %v1430 = vpack.c.bf16 %v1427, %v1426
    %v1431 = vpack.c.bf16 %v1429, %v1428
    %s1432 = scalar_lea.vmem [#allocation2], 64
    %v1433 = vld [vmem:[%s1432] sm:$0xf]
    %v1434 = vld [vmem:[%s1432 + $0x4] sm:$0xf]
    %v1435 = vld [vmem:[%s1432 + $0x8] sm:$0xf]
    %v1436 = vld [vmem:[%s1432 + $0xc] sm:$0xf]
    %v1437 = vld [vmem:[%s1432 + $0x10] sm:$0xf]
    %v1438 = vld [vmem:[%s1432 + $0x14] sm:$0xf]
    %v1439 = vld [vmem:[%s1432 + $0x18] sm:$0xf]
    %v1440 = vld [vmem:[%s1432 + $0x1c] sm:$0xf]
    %v1441 = vld [vmem:[%s4 + $0x3] sm:$0x1]
    %v1442 = vlaneseq
    %v1443 = vshrl.u32 %v1442, 7
    %v1444 = vsub.s32 0, %v1443
    %v1445 = vrot.slane %v1441, %v1444
    %v1454 = vunpack.c.l.b16 %v1433
    %v1455 = vunpack.c.l.b16 %v1434
    %v1456 = vunpack.c.l.b16 %v1435
    %v1457 = vunpack.c.l.b16 %v1436
    %v1458 = vunpack.c.l.b16 %v1437
    %v1459 = vunpack.c.l.b16 %v1438
    %v1460 = vunpack.c.l.b16 %v1439
    %v1461 = vunpack.c.l.b16 %v1440
    %v1462 = vpack.c.b16 %v1455, %v1454
    %v1463 = vpack.c.b16 %v1457, %v1456
    %v1464 = vpack.c.b16 %v1459, %v1458
    %v1465 = vpack.c.b16 %v1461, %v1460
    %v1471 = vsel %vm1246, %v1430, 0
    %v1474 = vsel %vm1246, %v1431, 0
    %1476 = vmatprep.subr.bf16.mxu0 0
    %1477 = vmatpush1.bf16.msra.mxu0 0
    %1478 = vmatprep.subr.bf16.mxu0 0
    %1479 = vmatpush1.bf16.msra.mxu0 0
    %1480 = vmatprep.subr.bf16.mxu0 0
    %1481 = vmatpush1.bf16.msra.mxu0 0
    %1482 = vmatprep.subr.bf16.mxu0 0
    %1483 = vmatpush1.bf16.msra.mxu0 0
    %1484 = vmatprep.subr.bf16.mxu0 0
    %1485 = vmatpush1.bf16.msra.mxu0 %v1465
    %1486 = vmatprep.subr.bf16.mxu0 0
    %1487 = vmatpush1.bf16.msra.mxu0 %v1464
    %1488 = vmatprep.subr.bf16.mxu0 0
    %1489 = vmatpush1.bf16.msra.mxu0 %v1463
    %1490 = vmatprep.subr.bf16.mxu0 0
    %1491 = vmatpush1.bf16.msra.mxu0 %v1462
    %1492 = vmatprep.subr.bf16.mxu0 0
    %1493 = vmatpush2.bf16.msra.mxu0 0
    %1494 = vmatprep.subr.bf16.mxu0 0
    %1495 = vmatpush2.bf16.msra.mxu0 0
    %1496 = vmatprep.subr.bf16.mxu0 0
    %1497 = vmatpush2.bf16.msra.mxu0 0
    %1498 = vmatprep.subr.bf16.mxu0 0
    %1499 = vmatpush2.bf16.msra.mxu0 0
    %1500 = vmatprep.subr.bf16.mxu0 0
    %1501 = vmatpush2.bf16.msra.mxu0 0
    %1502 = vmatprep.subr.bf16.mxu0 0
    %1503 = vmatpush2.bf16.msra.mxu0 0
    %1504 = vmatprep.subr.bf16.mxu0 0
    %1505 = vmatpush2.bf16.msra.mxu0 0
    %1506 = vmatprep.subr.bf16.mxu0 0
    %1507 = vmatpush2.bf16.msra.mxu0 0
    %1508 = vmatprep.mubr.bf16.mxu0 0
    %1509 = vmatmul.mubr.bf16.gmra.mxu0 %v1471
    %v1510 = vpop.f32.mrf.mxu0
    %v1511 = vadd.f32 %v1445, %v1510
    %v1512 = vpop.f32.mrf.mxu0
    %v1513 = vpop.f32.mrf.mxu0
    %v1514 = vadd.f32 %v1445, %v1513
    %v1515 = vpop.f32.mrf.mxu0
    %1516 = vmatprep.mubr.bf16.mxu0 0
    %1517 = vmatmul.mubr.bf16.gmra.mxu0 %v1474
    %v1518 = vpop.f32.mrf.mxu0
    %v1519 = vadd.f32 %v1445, %v1518
    %v1520 = vpop.f32.mrf.mxu0
    %v1521 = vpop.f32.mrf.mxu0
    %v1522 = vadd.f32 %v1445, %v1521
    %v1523 = vpop.f32.mrf.mxu0
    %1524 = vdwg.mxu0
    %vm1525 = vcmp.gt.f32.partialorder %v1511, 0.0
    %vm1526 = vcmp.gt.f32.partialorder %v1514, 0.0
    %vm1527 = vcmp.gt.f32.partialorder %v1519, 0.0
    %vm1528 = vcmp.gt.f32.partialorder %v1522, 0.0
    %v1529 = vmul.f32 %v1511, 0.01
    %v1530 = vmul.f32 %v1514, 0.01
    %v1531 = vmul.f32 %v1519, 0.01
    %v1532 = vmul.f32 %v1522, 0.01
    %v1533 = vsel %vm1525, %v1511, %v1529
    %v1534 = vsel %vm1526, %v1514, %v1530
    %v1535 = vsel %vm1527, %v1519, %v1531
    %v1536 = vsel %vm1528, %v1522, %v1532
    %v1537 = vpack.c.bf16 %v1534, %v1533
    %v1538 = vpack.c.bf16 %v1536, %v1535
    %s1539 = scalar_lea.vmem [#allocation2], 96
    %v1540 = vld [vmem:[%s1539] sm:$0xf]
    %v1541 = vld [vmem:[%s1539 + $0x4] sm:$0xf]
    %v1542 = vld [vmem:[%s1539 + $0x8] sm:$0xf]
    %v1543 = vld [vmem:[%s1539 + $0xc] sm:$0xf]
    %v1544 = vld [vmem:[%s1539 + $0x10] sm:$0xf]
    %v1545 = vld [vmem:[%s1539 + $0x14] sm:$0xf]
    %v1546 = vld [vmem:[%s1539 + $0x18] sm:$0xf]
    %v1547 = vld [vmem:[%s1539 + $0x1c] sm:$0xf]
    %s1548 = scalar_lea.vmem %s3, 40
    %v1549 = vld [vmem:[%s1548] sm:$0xf]
    %v1550 = vld [vmem:[%s1548 + $0x4] sm:$0xf]
    %v1551 = vld [vmem:[%s1548 + $0x8] sm:$0xf]
    %v1552 = vld [vmem:[%s1548 + $0xc] sm:$0xf]
    %v1553 = vld [vmem:[%s1548 + $0x10] sm:$0x3]
    %v1559 = vunpack.c.l.b16 %v1549
    %v1560 = vunpack.c.l.b16 %v1550
    %v1561 = vunpack.c.l.b16 %v1551
    %v1562 = vunpack.c.l.b16 %v1552
    %v1563 = vunpack.c.l.b16 %v1553
    %v1564 = vpack.c.b16 %v1560, %v1559
    %v1565 = vpack.c.b16 %v1562, %v1561
    %v1566 = vpack.c.b16 %v1563, %v1563
    %v1570 = vand.u32 %v1566, %v1068
    %1572 = vmatprep.subr.bf16.mxu0 0
    %1573 = vmatpush1.bf16.msra.mxu0 0
    %1574 = vmatprep.subr.bf16.mxu0 0
    %1575 = vmatpush1.bf16.msra.mxu0 0
    %1576 = vmatprep.subr.bf16.mxu0 0
    %1577 = vmatpush1.bf16.msra.mxu0 0
    %1578 = vmatprep.subr.bf16.mxu0 0
    %1579 = vmatpush1.bf16.msra.mxu0 0
    %1580 = vmatprep.subr.bf16.mxu0 0
    %1581 = vmatpush1.bf16.msra.mxu0 0
    %1582 = vmatprep.subr.bf16.mxu0 0
    %1583 = vmatpush1.bf16.msra.mxu0 %v1570
    %1584 = vmatprep.subr.bf16.mxu0 0
    %1585 = vmatpush1.bf16.msra.mxu0 %v1565
    %1586 = vmatprep.subr.bf16.mxu0 0
    %1587 = vmatpush1.bf16.msra.mxu0 %v1564
    %1588 = vmatprep.subr.bf16.mxu0 0
    %1589 = vmatpush2.bf16.msra.mxu0 0
    %1590 = vmatprep.subr.bf16.mxu0 0
    %1591 = vmatpush2.bf16.msra.mxu0 0
    %1592 = vmatprep.subr.bf16.mxu0 0
    %1593 = vmatpush2.bf16.msra.mxu0 0
    %1594 = vmatprep.subr.bf16.mxu0 0
    %1595 = vmatpush2.bf16.msra.mxu0 0
    %1596 = vmatprep.subr.bf16.mxu0 0
    %1597 = vmatpush2.bf16.msra.mxu0 0
    %1598 = vmatprep.subr.bf16.mxu0 0
    %1599 = vmatpush2.bf16.msra.mxu0 0
    %1600 = vmatprep.subr.bf16.mxu0 0
    %1601 = vmatpush2.bf16.msra.mxu0 0
    %1602 = vmatprep.subr.bf16.mxu0 0
    %1603 = vmatpush2.bf16.msra.mxu0 0
    %1604 = vmatprep.mubr.bf16.mxu0 0
    %1605 = vmatmul.mubr.bf16.gmra.mxu0 %v1165
    %v1606 = vpop.f32.mrf.mxu0
    %v1607 = vadd.f32 0.0, %v1606
    %v1608 = vpop.f32.mrf.mxu0
    %v1609 = vpop.f32.mrf.mxu0
    %v1610 = vadd.f32 0.0, %v1609
    %v1611 = vpop.f32.mrf.mxu0
    %1612 = vmatprep.mubr.bf16.mxu0 0
    %1613 = vmatmul.mubr.bf16.gmra.mxu0 %v1168
    %v1614 = vpop.f32.mrf.mxu0
    %v1615 = vadd.f32 0.0, %v1614
    %v1616 = vpop.f32.mrf.mxu0
    %v1617 = vpop.f32.mrf.mxu0
    %v1618 = vadd.f32 0.0, %v1617
    %v1619 = vpop.f32.mrf.mxu0
    %1620 = vdwg.mxu0
    %v1629 = vunpack.c.l.b16 %v1540
    %v1630 = vunpack.c.l.b16 %v1541
    %v1631 = vunpack.c.l.b16 %v1542
    %v1632 = vunpack.c.l.b16 %v1543
    %v1633 = vunpack.c.l.b16 %v1544
    %v1634 = vunpack.c.l.b16 %v1545
    %v1635 = vunpack.c.l.b16 %v1546
    %v1636 = vunpack.c.l.b16 %v1547
    %v1637 = vpack.c.b16 %v1630, %v1629
    %v1638 = vpack.c.b16 %v1632, %v1631
    %v1639 = vpack.c.b16 %v1634, %v1633
    %v1640 = vpack.c.b16 %v1636, %v1635
    %v1646 = vsel %vm1246, %v1537, 0
    %v1649 = vsel %vm1246, %v1538, 0
    %1651 = vmatprep.subr.bf16.mxu0 0
    %1652 = vmatpush1.bf16.msra.mxu0 0
    %1653 = vmatprep.subr.bf16.mxu0 0
    %1654 = vmatpush1.bf16.msra.mxu0 0
    %1655 = vmatprep.subr.bf16.mxu0 0
    %1656 = vmatpush1.bf16.msra.mxu0 0
    %1657 = vmatprep.subr.bf16.mxu0 0
    %1658 = vmatpush1.bf16.msra.mxu0 0
    %1659 = vmatprep.subr.bf16.mxu0 0
    %1660 = vmatpush1.bf16.msra.mxu0 %v1640
    %1661 = vmatprep.subr.bf16.mxu0 0
    %1662 = vmatpush1.bf16.msra.mxu0 %v1639
    %1663 = vmatprep.subr.bf16.mxu0 0
    %1664 = vmatpush1.bf16.msra.mxu0 %v1638
    %1665 = vmatprep.subr.bf16.mxu0 0
    %1666 = vmatpush1.bf16.msra.mxu0 %v1637
    %1667 = vmatprep.subr.bf16.mxu0 0
    %1668 = vmatpush2.bf16.msra.mxu0 0
    %1669 = vmatprep.subr.bf16.mxu0 0
    %1670 = vmatpush2.bf16.msra.mxu0 0
    %1671 = vmatprep.subr.bf16.mxu0 0
    %1672 = vmatpush2.bf16.msra.mxu0 0
    %1673 = vmatprep.subr.bf16.mxu0 0
    %1674 = vmatpush2.bf16.msra.mxu0 0
    %1675 = vmatprep.subr.bf16.mxu0 0
    %1676 = vmatpush2.bf16.msra.mxu0 0
    %1677 = vmatprep.subr.bf16.mxu0 0
    %1678 = vmatpush2.bf16.msra.mxu0 0
    %1679 = vmatprep.subr.bf16.mxu0 0
    %1680 = vmatpush2.bf16.msra.mxu0 0
    %1681 = vmatprep.subr.bf16.mxu0 0
    %1682 = vmatpush2.bf16.msra.mxu0 0
    %1683 = vmatprep.mubr.bf16.mxu0 0
    %1684 = vmatmul.mubr.bf16.gmra.mxu0 %v1646
    %v1685 = vpop.f32.mrf.mxu0
    %v1686 = vadd.f32 %v1607, %v1685
    %v1687 = vpop.f32.mrf.mxu0
    %v1688 = vpop.f32.mrf.mxu0
    %v1689 = vadd.f32 %v1610, %v1688
    %v1690 = vpop.f32.mrf.mxu0
    %1691 = vmatprep.mubr.bf16.mxu0 0
    %1692 = vmatmul.mubr.bf16.gmra.mxu0 %v1649
    %v1693 = vpop.f32.mrf.mxu0
    %v1694 = vadd.f32 %v1615, %v1693
    %v1695 = vpop.f32.mrf.mxu0
    %v1696 = vpop.f32.mrf.mxu0
    %v1697 = vadd.f32 %v1618, %v1696
    %v1698 = vpop.f32.mrf.mxu0
    %1699 = vdwg.mxu0
    %v1700 = vld [vmem:[%s4 + $0x4] sm:$0x1]
    %v1701 = vlaneseq
    %v1702 = vshrl.u32 %v1701, 7
    %v1703 = vsub.s32 0, %v1702
    %v1704 = vrot.slane %v1700, %v1703
    %v1705 = vadd.f32 %v1686, %v1704
    %v1706 = vadd.f32 %v1689, %v1704
    %v1707 = vadd.f32 %v1694, %v1704
    %v1708 = vadd.f32 %v1697, %v1704
    %vm1709 = vcmp.gt.f32.partialorder %v1705, 0.0
    %vm1710 = vcmp.gt.f32.partialorder %v1706, 0.0
    %vm1711 = vcmp.gt.f32.partialorder %v1707, 0.0
    %vm1712 = vcmp.gt.f32.partialorder %v1708, 0.0
    %v1713 = vmul.f32 %v1705, 0.01
    %v1714 = vmul.f32 %v1706, 0.01
    %v1715 = vmul.f32 %v1707, 0.01
    %v1716 = vmul.f32 %v1708, 0.01
    %v1717 = vsel %vm1709, %v1705, %v1713
    %v1718 = vsel %vm1710, %v1706, %v1714
    %v1719 = vsel %vm1711, %v1707, %v1715
    %v1720 = vsel %vm1712, %v1708, %v1716
    %v1721 = vpack.c.bf16 %v1718, %v1717
    %v1722 = vpack.c.bf16 %v1720, %v1719
    %s1723 = scalar_lea.vmem [#allocation2], 128
    %v1724 = vld [vmem:[%s1723] sm:$0xf]
    %v1725 = vld [vmem:[%s1723 + $0x4] sm:$0xf]
    %v1726 = vld [vmem:[%s1723 + $0x8] sm:$0xf]
    %v1727 = vld [vmem:[%s1723 + $0xc] sm:$0xf]
    %v1728 = vld [vmem:[%s1723 + $0x10] sm:$0xf]
    %v1729 = vld [vmem:[%s1723 + $0x14] sm:$0xf]
    %v1730 = vld [vmem:[%s1723 + $0x18] sm:$0xf]
    %v1731 = vld [vmem:[%s1723 + $0x1c] sm:$0xf]
    %v1732 = vld [vmem:[%s4 + $0x5] sm:$0x1]
    %v1733 = vlaneseq
    %v1734 = vshrl.u32 %v1733, 7
    %v1735 = vsub.s32 0, %v1734
    %v1736 = vrot.slane %v1732, %v1735
    %v1745 = vunpack.c.l.b16 %v1724
    %v1746 = vunpack.c.l.b16 %v1725
    %v1747 = vunpack.c.l.b16 %v1726
    %v1748 = vunpack.c.l.b16 %v1727
    %v1749 = vunpack.c.l.b16 %v1728
    %v1750 = vunpack.c.l.b16 %v1729
    %v1751 = vunpack.c.l.b16 %v1730
    %v1752 = vunpack.c.l.b16 %v1731
    %v1753 = vpack.c.b16 %v1746, %v1745
    %v1754 = vpack.c.b16 %v1748, %v1747
    %v1755 = vpack.c.b16 %v1750, %v1749
    %v1756 = vpack.c.b16 %v1752, %v1751
    %v1762 = vsel %vm1246, %v1721, 0
    %v1765 = vsel %vm1246, %v1722, 0
    %1767 = vmatprep.subr.bf16.mxu0 0
    %1768 = vmatpush1.bf16.msra.mxu0 0
    %1769 = vmatprep.subr.bf16.mxu0 0
    %1770 = vmatpush1.bf16.msra.mxu0 0
    %1771 = vmatprep.subr.bf16.mxu0 0
    %1772 = vmatpush1.bf16.msra.mxu0 0
    %1773 = vmatprep.subr.bf16.mxu0 0
    %1774 = vmatpush1.bf16.msra.mxu0 0
    %1775 = vmatprep.subr.bf16.mxu0 0
    %1776 = vmatpush1.bf16.msra.mxu0 %v1756
    %1777 = vmatprep.subr.bf16.mxu0 0
    %1778 = vmatpush1.bf16.msra.mxu0 %v1755
    %1779 = vmatprep.subr.bf16.mxu0 0
    %1780 = vmatpush1.bf16.msra.mxu0 %v1754
    %1781 = vmatprep.subr.bf16.mxu0 0
    %1782 = vmatpush1.bf16.msra.mxu0 %v1753
    %1783 = vmatprep.subr.bf16.mxu0 0
    %1784 = vmatpush2.bf16.msra.mxu0 0
    %1785 = vmatprep.subr.bf16.mxu0 0
    %1786 = vmatpush2.bf16.msra.mxu0 0
    %1787 = vmatprep.subr.bf16.mxu0 0
    %1788 = vmatpush2.bf16.msra.mxu0 0
    %1789 = vmatprep.subr.bf16.mxu0 0
    %1790 = vmatpush2.bf16.msra.mxu0 0
    %1791 = vmatprep.subr.bf16.mxu0 0
    %1792 = vmatpush2.bf16.msra.mxu0 0
    %1793 = vmatprep.subr.bf16.mxu0 0
    %1794 = vmatpush2.bf16.msra.mxu0 0
    %1795 = vmatprep.subr.bf16.mxu0 0
    %1796 = vmatpush2.bf16.msra.mxu0 0
    %1797 = vmatprep.subr.bf16.mxu0 0
    %1798 = vmatpush2.bf16.msra.mxu0 0
    %1799 = vmatprep.mubr.bf16.mxu0 0
    %1800 = vmatmul.mubr.bf16.gmra.mxu0 %v1762
    %v1801 = vpop.f32.mrf.mxu0
    %v1802 = vadd.f32 %v1736, %v1801
    %v1803 = vpop.f32.mrf.mxu0
    %v1804 = vpop.f32.mrf.mxu0
    %v1805 = vadd.f32 %v1736, %v1804
    %v1806 = vpop.f32.mrf.mxu0
    %1807 = vmatprep.mubr.bf16.mxu0 0
    %1808 = vmatmul.mubr.bf16.gmra.mxu0 %v1765
    %v1809 = vpop.f32.mrf.mxu0
    %v1810 = vadd.f32 %v1736, %v1809
    %v1811 = vpop.f32.mrf.mxu0
    %v1812 = vpop.f32.mrf.mxu0
    %v1813 = vadd.f32 %v1736, %v1812
    %v1814 = vpop.f32.mrf.mxu0
    %1815 = vdwg.mxu0
    %vm1816 = vcmp.gt.f32.partialorder %v1802, 0.0
    %vm1817 = vcmp.gt.f32.partialorder %v1805, 0.0
    %vm1818 = vcmp.gt.f32.partialorder %v1810, 0.0
    %vm1819 = vcmp.gt.f32.partialorder %v1813, 0.0
    %v1820 = vmul.f32 %v1802, 0.01
    %v1821 = vmul.f32 %v1805, 0.01
    %v1822 = vmul.f32 %v1810, 0.01
    %v1823 = vmul.f32 %v1813, 0.01
    %v1824 = vsel %vm1816, %v1802, %v1820
    %v1825 = vsel %vm1817, %v1805, %v1821
    %v1826 = vsel %vm1818, %v1810, %v1822
    %v1827 = vsel %vm1819, %v1813, %v1823
    %v1828 = vpack.c.bf16 %v1825, %v1824
    %v1829 = vpack.c.bf16 %v1827, %v1826
    %s1830 = scalar_lea.vmem [#allocation2], 160
    %v1831 = vld [vmem:[%s1830] sm:$0xf]
    %v1832 = vld [vmem:[%s1830 + $0x4] sm:$0xf]
    %v1833 = vld [vmem:[%s1830 + $0x8] sm:$0xf]
    %v1834 = vld [vmem:[%s1830 + $0xc] sm:$0xf]
    %v1835 = vld [vmem:[%s1830 + $0x10] sm:$0xf]
    %v1836 = vld [vmem:[%s1830 + $0x14] sm:$0xf]
    %v1837 = vld [vmem:[%s1830 + $0x18] sm:$0xf]
    %v1838 = vld [vmem:[%s1830 + $0x1c] sm:$0xf]
    %v1839 = vld [vmem:[%s4 + $0x6] sm:$0x1]
    %v1840 = vlaneseq
    %v1841 = vshrl.u32 %v1840, 7
    %v1842 = vsub.s32 0, %v1841
    %v1843 = vrot.slane %v1839, %v1842
    %v1852 = vunpack.c.l.b16 %v1831
    %v1853 = vunpack.c.l.b16 %v1832
    %v1854 = vunpack.c.l.b16 %v1833
    %v1855 = vunpack.c.l.b16 %v1834
    %v1856 = vunpack.c.l.b16 %v1835
    %v1857 = vunpack.c.l.b16 %v1836
    %v1858 = vunpack.c.l.b16 %v1837
    %v1859 = vunpack.c.l.b16 %v1838
    %v1860 = vpack.c.b16 %v1853, %v1852
    %v1861 = vpack.c.b16 %v1855, %v1854
    %v1862 = vpack.c.b16 %v1857, %v1856
    %v1863 = vpack.c.b16 %v1859, %v1858
    %v1869 = vsel %vm1246, %v1828, 0
    %v1872 = vsel %vm1246, %v1829, 0
    %1874 = vmatprep.subr.bf16.mxu0 0
    %1875 = vmatpush1.bf16.msra.mxu0 0
    %1876 = vmatprep.subr.bf16.mxu0 0
    %1877 = vmatpush1.bf16.msra.mxu0 0
    %1878 = vmatprep.subr.bf16.mxu0 0
    %1879 = vmatpush1.bf16.msra.mxu0 0
    %1880 = vmatprep.subr.bf16.mxu0 0
    %1881 = vmatpush1.bf16.msra.mxu0 0
    %1882 = vmatprep.subr.bf16.mxu0 0
    %1883 = vmatpush1.bf16.msra.mxu0 %v1863
    %1884 = vmatprep.subr.bf16.mxu0 0
    %1885 = vmatpush1.bf16.msra.mxu0 %v1862
    %1886 = vmatprep.subr.bf16.mxu0 0
    %1887 = vmatpush1.bf16.msra.mxu0 %v1861
    %1888 = vmatprep.subr.bf16.mxu0 0
    %1889 = vmatpush1.bf16.msra.mxu0 %v1860
    %1890 = vmatprep.subr.bf16.mxu0 0
    %1891 = vmatpush2.bf16.msra.mxu0 0
    %1892 = vmatprep.subr.bf16.mxu0 0
    %1893 = vmatpush2.bf16.msra.mxu0 0
    %1894 = vmatprep.subr.bf16.mxu0 0
    %1895 = vmatpush2.bf16.msra.mxu0 0
    %1896 = vmatprep.subr.bf16.mxu0 0
    %1897 = vmatpush2.bf16.msra.mxu0 0
    %1898 = vmatprep.subr.bf16.mxu0 0
    %1899 = vmatpush2.bf16.msra.mxu0 0
    %1900 = vmatprep.subr.bf16.mxu0 0
    %1901 = vmatpush2.bf16.msra.mxu0 0
    %1902 = vmatprep.subr.bf16.mxu0 0
    %1903 = vmatpush2.bf16.msra.mxu0 0
    %1904 = vmatprep.subr.bf16.mxu0 0
    %1905 = vmatpush2.bf16.msra.mxu0 0
    %1906 = vmatprep.mubr.bf16.mxu0 0
    %1907 = vmatmul.mubr.bf16.gmra.mxu0 %v1869
    %v1908 = vpop.f32.mrf.mxu0
    %v1909 = vadd.f32 %v1843, %v1908
    %v1910 = vpop.f32.mrf.mxu0
    %v1911 = vpop.f32.mrf.mxu0
    %v1912 = vadd.f32 %v1843, %v1911
    %v1913 = vpop.f32.mrf.mxu0
    %1914 = vmatprep.mubr.bf16.mxu0 0
    %1915 = vmatmul.mubr.bf16.gmra.mxu0 %v1872
    %v1916 = vpop.f32.mrf.mxu0
    %v1917 = vadd.f32 %v1843, %v1916
    %v1918 = vpop.f32.mrf.mxu0
    %v1919 = vpop.f32.mrf.mxu0
    %v1920 = vadd.f32 %v1843, %v1919
    %v1921 = vpop.f32.mrf.mxu0
    %1922 = vdwg.mxu0
    %vm1923 = vcmp.gt.f32.partialorder %v1909, 0.0
    %vm1924 = vcmp.gt.f32.partialorder %v1912, 0.0
    %vm1925 = vcmp.gt.f32.partialorder %v1917, 0.0
    %vm1926 = vcmp.gt.f32.partialorder %v1920, 0.0
    %v1927 = vmul.f32 %v1909, 0.01
    %v1928 = vmul.f32 %v1912, 0.01
    %v1929 = vmul.f32 %v1917, 0.01
    %v1930 = vmul.f32 %v1920, 0.01
    %v1931 = vsel %vm1923, %v1909, %v1927
    %v1932 = vsel %vm1924, %v1912, %v1928
    %v1933 = vsel %vm1925, %v1917, %v1929
    %v1934 = vsel %vm1926, %v1920, %v1930
    %v1935 = vpack.c.bf16 %v1932, %v1931
    %v1936 = vpack.c.bf16 %v1934, %v1933
    %s1937 = scalar_lea.vmem [#allocation2], 192
    %v1938 = vld [vmem:[%s1937] sm:$0xf]
    %v1939 = vld [vmem:[%s1937 + $0x4] sm:$0xf]
    %v1940 = vld [vmem:[%s1937 + $0x8] sm:$0xf]
    %v1941 = vld [vmem:[%s1937 + $0xc] sm:$0xf]
    %v1942 = vld [vmem:[%s1937 + $0x10] sm:$0xf]
    %v1943 = vld [vmem:[%s1937 + $0x14] sm:$0xf]
    %v1944 = vld [vmem:[%s1937 + $0x18] sm:$0xf]
    %v1945 = vld [vmem:[%s1937 + $0x1c] sm:$0xf]
    %s1946 = scalar_lea.vmem %s3, 60
    %v1947 = vld [vmem:[%s1946] sm:$0xf]
    %v1948 = vld [vmem:[%s1946 + $0x4] sm:$0xf]
    %v1949 = vld [vmem:[%s1946 + $0x8] sm:$0xf]
    %v1950 = vld [vmem:[%s1946 + $0xc] sm:$0xf]
    %v1951 = vld [vmem:[%s1946 + $0x10] sm:$0x3]
    %v1957 = vunpack.c.l.b16 %v1947
    %v1958 = vunpack.c.l.b16 %v1948
    %v1959 = vunpack.c.l.b16 %v1949
    %v1960 = vunpack.c.l.b16 %v1950
    %v1961 = vunpack.c.l.b16 %v1951
    %v1962 = vpack.c.b16 %v1958, %v1957
    %v1963 = vpack.c.b16 %v1960, %v1959
    %v1964 = vpack.c.b16 %v1961, %v1961
    %v1968 = vand.u32 %v1964, %v1068
    %1970 = vmatprep.subr.bf16.mxu0 0
    %1971 = vmatpush1.bf16.msra.mxu0 0
    %1972 = vmatprep.subr.bf16.mxu0 0
    %1973 = vmatpush1.bf16.msra.mxu0 0
    %1974 = vmatprep.subr.bf16.mxu0 0
    %1975 = vmatpush1.bf16.msra.mxu0 0
    %1976 = vmatprep.subr.bf16.mxu0 0
    %1977 = vmatpush1.bf16.msra.mxu0 0
    %1978 = vmatprep.subr.bf16.mxu0 0
    %1979 = vmatpush1.bf16.msra.mxu0 0
    %1980 = vmatprep.subr.bf16.mxu0 0
    %1981 = vmatpush1.bf16.msra.mxu0 %v1968
    %1982 = vmatprep.subr.bf16.mxu0 0
    %1983 = vmatpush1.bf16.msra.mxu0 %v1963
    %1984 = vmatprep.subr.bf16.mxu0 0
    %1985 = vmatpush1.bf16.msra.mxu0 %v1962
    %1986 = vmatprep.subr.bf16.mxu0 0
    %1987 = vmatpush2.bf16.msra.mxu0 0
    %1988 = vmatprep.subr.bf16.mxu0 0
    %1989 = vmatpush2.bf16.msra.mxu0 0
    %1990 = vmatprep.subr.bf16.mxu0 0
    %1991 = vmatpush2.bf16.msra.mxu0 0
    %1992 = vmatprep.subr.bf16.mxu0 0
    %1993 = vmatpush2.bf16.msra.mxu0 0
    %1994 = vmatprep.subr.bf16.mxu0 0
    %1995 = vmatpush2.bf16.msra.mxu0 0
    %1996 = vmatprep.subr.bf16.mxu0 0
    %1997 = vmatpush2.bf16.msra.mxu0 0
    %1998 = vmatprep.subr.bf16.mxu0 0
    %1999 = vmatpush2.bf16.msra.mxu0 0
    %2000 = vmatprep.subr.bf16.mxu0 0
    %2001 = vmatpush2.bf16.msra.mxu0 0
    %2002 = vmatprep.mubr.bf16.mxu0 0
    %2003 = vmatmul.mubr.bf16.gmra.mxu0 %v1165
    %v2004 = vpop.f32.mrf.mxu0
    %v2005 = vadd.f32 0.0, %v2004
    %v2006 = vpop.f32.mrf.mxu0
    %v2007 = vpop.f32.mrf.mxu0
    %v2008 = vadd.f32 0.0, %v2007
    %v2009 = vpop.f32.mrf.mxu0
    %2010 = vmatprep.mubr.bf16.mxu0 0
    %2011 = vmatmul.mubr.bf16.gmra.mxu0 %v1168
    %v2012 = vpop.f32.mrf.mxu0
    %v2013 = vadd.f32 0.0, %v2012
    %v2014 = vpop.f32.mrf.mxu0
    %v2015 = vpop.f32.mrf.mxu0
    %v2016 = vadd.f32 0.0, %v2015
    %v2017 = vpop.f32.mrf.mxu0
    %2018 = vdwg.mxu0
    %v2027 = vunpack.c.l.b16 %v1938
    %v2028 = vunpack.c.l.b16 %v1939
    %v2029 = vunpack.c.l.b16 %v1940
    %v2030 = vunpack.c.l.b16 %v1941
    %v2031 = vunpack.c.l.b16 %v1942
    %v2032 = vunpack.c.l.b16 %v1943
    %v2033 = vunpack.c.l.b16 %v1944
    %v2034 = vunpack.c.l.b16 %v1945
    %v2035 = vpack.c.b16 %v2028, %v2027
    %v2036 = vpack.c.b16 %v2030, %v2029
    %v2037 = vpack.c.b16 %v2032, %v2031
    %v2038 = vpack.c.b16 %v2034, %v2033
    %v2044 = vsel %vm1246, %v1935, 0
    %v2047 = vsel %vm1246, %v1936, 0
    %2049 = vmatprep.subr.bf16.mxu0 0
    %2050 = vmatpush1.bf16.msra.mxu0 0
    %2051 = vmatprep.subr.bf16.mxu0 0
    %2052 = vmatpush1.bf16.msra.mxu0 0
    %2053 = vmatprep.subr.bf16.mxu0 0
    %2054 = vmatpush1.bf16.msra.mxu0 0
    %2055 = vmatprep.subr.bf16.mxu0 0
    %2056 = vmatpush1.bf16.msra.mxu0 0
    %2057 = vmatprep.subr.bf16.mxu0 0
    %2058 = vmatpush1.bf16.msra.mxu0 %v2038
    %2059 = vmatprep.subr.bf16.mxu0 0
    %2060 = vmatpush1.bf16.msra.mxu0 %v2037
    %2061 = vmatprep.subr.bf16.mxu0 0
    %2062 = vmatpush1.bf16.msra.mxu0 %v2036
    %2063 = vmatprep.subr.bf16.mxu0 0
    %2064 = vmatpush1.bf16.msra.mxu0 %v2035
    %2065 = vmatprep.subr.bf16.mxu0 0
    %2066 = vmatpush2.bf16.msra.mxu0 0
    %2067 = vmatprep.subr.bf16.mxu0 0
    %2068 = vmatpush2.bf16.msra.mxu0 0
    %2069 = vmatprep.subr.bf16.mxu0 0
    %2070 = vmatpush2.bf16.msra.mxu0 0
    %2071 = vmatprep.subr.bf16.mxu0 0
    %2072 = vmatpush2.bf16.msra.mxu0 0
    %2073 = vmatprep.subr.bf16.mxu0 0
    %2074 = vmatpush2.bf16.msra.mxu0 0
    %2075 = vmatprep.subr.bf16.mxu0 0
    %2076 = vmatpush2.bf16.msra.mxu0 0
    %2077 = vmatprep.subr.bf16.mxu0 0
    %2078 = vmatpush2.bf16.msra.mxu0 0
    %2079 = vmatprep.subr.bf16.mxu0 0
    %2080 = vmatpush2.bf16.msra.mxu0 0
    %2081 = vmatprep.mubr.bf16.mxu0 0
    %2082 = vmatmul.mubr.bf16.gmra.mxu0 %v2044
    %v2083 = vpop.f32.mrf.mxu0
    %v2084 = vadd.f32 %v2005, %v2083
    %v2085 = vpop.f32.mrf.mxu0
    %v2086 = vpop.f32.mrf.mxu0
    %v2087 = vadd.f32 %v2008, %v2086
    %v2088 = vpop.f32.mrf.mxu0
    %2089 = vmatprep.mubr.bf16.mxu0 0
    %2090 = vmatmul.mubr.bf16.gmra.mxu0 %v2047
    %v2091 = vpop.f32.mrf.mxu0
    %v2092 = vadd.f32 %v2013, %v2091
    %v2093 = vpop.f32.mrf.mxu0
    %v2094 = vpop.f32.mrf.mxu0
    %v2095 = vadd.f32 %v2016, %v2094
    %v2096 = vpop.f32.mrf.mxu0
    %2097 = vdwg.mxu0
    %v2098 = vld [vmem:[%s4 + $0x7] sm:$0x1]
    %v2099 = vlaneseq
    %v2100 = vshrl.u32 %v2099, 7
    %v2101 = vsub.s32 0, %v2100
    %v2102 = vrot.slane %v2098, %v2101
    %v2103 = vadd.f32 %v2084, %v2102
    %v2104 = vadd.f32 %v2087, %v2102
    %v2105 = vadd.f32 %v2092, %v2102
    %v2106 = vadd.f32 %v2095, %v2102
    %vm2107 = vcmp.gt.f32.partialorder %v2103, 0.0
    %vm2108 = vcmp.gt.f32.partialorder %v2104, 0.0
    %vm2109 = vcmp.gt.f32.partialorder %v2105, 0.0
    %vm2110 = vcmp.gt.f32.partialorder %v2106, 0.0
    %v2111 = vmul.f32 %v2103, 0.01
    %v2112 = vmul.f32 %v2104, 0.01
    %v2113 = vmul.f32 %v2105, 0.01
    %v2114 = vmul.f32 %v2106, 0.01
    %v2115 = vsel %vm2107, %v2103, %v2111
    %v2116 = vsel %vm2108, %v2104, %v2112
    %v2117 = vsel %vm2109, %v2105, %v2113
    %v2118 = vsel %vm2110, %v2106, %v2114
    %v2119 = vpack.c.bf16 %v2116, %v2115
    %v2120 = vpack.c.bf16 %v2118, %v2117
    %s2121 = scalar_lea.vmem [#allocation2], 224
    %v2122 = vld [vmem:[%s2121] sm:$0xf]
    %v2123 = vld [vmem:[%s2121 + $0x4] sm:$0xf]
    %v2124 = vld [vmem:[%s2121 + $0x8] sm:$0xf]
    %v2125 = vld [vmem:[%s2121 + $0xc] sm:$0xf]
    %v2126 = vld [vmem:[%s2121 + $0x10] sm:$0xf]
    %v2127 = vld [vmem:[%s2121 + $0x14] sm:$0xf]
    %v2128 = vld [vmem:[%s2121 + $0x18] sm:$0xf]
    %v2129 = vld [vmem:[%s2121 + $0x1c] sm:$0xf]
    %v2130 = vld [vmem:[%s4 + $0x8] sm:$0x1]
    %v2131 = vlaneseq
    %v2132 = vshrl.u32 %v2131, 7
    %v2133 = vsub.s32 0, %v2132
    %v2134 = vrot.slane %v2130, %v2133
    %v2143 = vunpack.c.l.b16 %v2122
    %v2144 = vunpack.c.l.b16 %v2123
    %v2145 = vunpack.c.l.b16 %v2124
    %v2146 = vunpack.c.l.b16 %v2125
    %v2147 = vunpack.c.l.b16 %v2126
    %v2148 = vunpack.c.l.b16 %v2127
    %v2149 = vunpack.c.l.b16 %v2128
    %v2150 = vunpack.c.l.b16 %v2129
    %v2151 = vpack.c.b16 %v2144, %v2143
    %v2152 = vpack.c.b16 %v2146, %v2145
    %v2153 = vpack.c.b16 %v2148, %v2147
    %v2154 = vpack.c.b16 %v2150, %v2149
    %v2160 = vsel %vm1246, %v2119, 0
    %v2163 = vsel %vm1246, %v2120, 0
    %2165 = vmatprep.subr.bf16.mxu0 0
    %2166 = vmatpush1.bf16.msra.mxu0 0
    %2167 = vmatprep.subr.bf16.mxu0 0
    %2168 = vmatpush1.bf16.msra.mxu0 0
    %2169 = vmatprep.subr.bf16.mxu0 0
    %2170 = vmatpush1.bf16.msra.mxu0 0
    %2171 = vmatprep.subr.bf16.mxu0 0
    %2172 = vmatpush1.bf16.msra.mxu0 0
    %2173 = vmatprep.subr.bf16.mxu0 0
    %2174 = vmatpush1.bf16.msra.mxu0 %v2154
    %2175 = vmatprep.subr.bf16.mxu0 0
    %2176 = vmatpush1.bf16.msra.mxu0 %v2153
    %2177 = vmatprep.subr.bf16.mxu0 0
    %2178 = vmatpush1.bf16.msra.mxu0 %v2152
    %2179 = vmatprep.subr.bf16.mxu0 0
    %2180 = vmatpush1.bf16.msra.mxu0 %v2151
    %2181 = vmatprep.subr.bf16.mxu0 0
    %2182 = vmatpush2.bf16.msra.mxu0 0
    %2183 = vmatprep.subr.bf16.mxu0 0
    %2184 = vmatpush2.bf16.msra.mxu0 0
    %2185 = vmatprep.subr.bf16.mxu0 0
    %2186 = vmatpush2.bf16.msra.mxu0 0
    %2187 = vmatprep.subr.bf16.mxu0 0
    %2188 = vmatpush2.bf16.msra.mxu0 0
    %2189 = vmatprep.subr.bf16.mxu0 0
    %2190 = vmatpush2.bf16.msra.mxu0 0
    %2191 = vmatprep.subr.bf16.mxu0 0
    %2192 = vmatpush2.bf16.msra.mxu0 0
    %2193 = vmatprep.subr.bf16.mxu0 0
    %2194 = vmatpush2.bf16.msra.mxu0 0
    %2195 = vmatprep.subr.bf16.mxu0 0
    %2196 = vmatpush2.bf16.msra.mxu0 0
    %2197 = vmatprep.mubr.bf16.mxu0 0
    %2198 = vmatmul.mubr.bf16.gmra.mxu0 %v2160
    %v2199 = vpop.f32.mrf.mxu0
    %v2200 = vadd.f32 %v2134, %v2199
    %v2201 = vpop.f32.mrf.mxu0
    %v2202 = vpop.f32.mrf.mxu0
    %v2203 = vadd.f32 %v2134, %v2202
    %v2204 = vpop.f32.mrf.mxu0
    %2205 = vmatprep.mubr.bf16.mxu0 0
    %2206 = vmatmul.mubr.bf16.gmra.mxu0 %v2163
    %v2207 = vpop.f32.mrf.mxu0
    %v2208 = vadd.f32 %v2134, %v2207
    %v2209 = vpop.f32.mrf.mxu0
    %v2210 = vpop.f32.mrf.mxu0
    %v2211 = vadd.f32 %v2134, %v2210
    %v2212 = vpop.f32.mrf.mxu0
    %2213 = vdwg.mxu0
    %vm2214 = vcmp.gt.f32.partialorder %v2200, 0.0
    %vm2215 = vcmp.gt.f32.partialorder %v2203, 0.0
    %vm2216 = vcmp.gt.f32.partialorder %v2208, 0.0
    %vm2217 = vcmp.gt.f32.partialorder %v2211, 0.0
    %v2218 = vmul.f32 %v2200, 0.01
    %v2219 = vmul.f32 %v2203, 0.01
    %v2220 = vmul.f32 %v2208, 0.01
    %v2221 = vmul.f32 %v2211, 0.01
    %v2222 = vsel %vm2214, %v2200, %v2218
    %v2223 = vsel %vm2215, %v2203, %v2219
    %v2224 = vsel %vm2216, %v2208, %v2220
    %v2225 = vsel %vm2217, %v2211, %v2221
    %v2226 = vpack.c.bf16 %v2223, %v2222
    %v2227 = vpack.c.bf16 %v2225, %v2224
    %v2228 = vld [vmem:[%s5] sm:$0xf]
    %v2229 = vld [vmem:[%s5 + $0x4] sm:$0xf]
    %v2230 = vld [vmem:[%s5 + $0x8] sm:$0xf]
    %v2231 = vld [vmem:[%s5 + $0xc] sm:$0xf]
    %v2232 = vld [vmem:[%s5 + $0x10] sm:$0xf]
    %v2233 = vld [vmem:[%s5 + $0x14] sm:$0xf]
    %v2234 = vld [vmem:[%s5 + $0x18] sm:$0xf]
    %v2235 = vld [vmem:[%s5 + $0x1c] sm:$0xf]
    %v2236 = vld [vmem:[%s6] sm:$0x1]
    %v2238 = vlaneseq
    %v2239 = vshrl.u32 %v2238, 7
    %v2240 = vsub.s32 0, %v2239
    %v2241 = vrot.slane %v2236, %v2240
    %v2251 = vunpack.c.l.b16 %v2228
    %v2252 = vunpack.c.l.b16 %v2229
    %v2253 = vunpack.c.l.b16 %v2230
    %v2254 = vunpack.c.l.b16 %v2231
    %v2255 = vunpack.c.l.b16 %v2232
    %v2256 = vunpack.c.l.b16 %v2233
    %v2257 = vunpack.c.l.b16 %v2234
    %v2258 = vunpack.c.l.b16 %v2235
    %v2259 = vpack.c.b16 %v2252, %v2251
    %v2260 = vpack.c.b16 %v2254, %v2253
    %v2261 = vpack.c.b16 %v2256, %v2255
    %v2262 = vpack.c.b16 %v2258, %v2257
    %v2268 = vsel %vm1246, %v2226, 0
    %v2271 = vsel %vm1246, %v2227, 0
    %2273 = vmatprep.subr.bf16.mxu0 0
    %2274 = vmatpush1.bf16.msra.mxu0 0
    %2275 = vmatprep.subr.bf16.mxu0 0
    %2276 = vmatpush1.bf16.msra.mxu0 0
    %2277 = vmatprep.subr.bf16.mxu0 0
    %2278 = vmatpush1.bf16.msra.mxu0 0
    %2279 = vmatprep.subr.bf16.mxu0 0
    %2280 = vmatpush1.bf16.msra.mxu0 0
    %2281 = vmatprep.subr.bf16.mxu0 0
    %2282 = vmatpush1.bf16.msra.mxu0 %v2262
    %2283 = vmatprep.subr.bf16.mxu0 0
    %2284 = vmatpush1.bf16.msra.mxu0 %v2261
    %2285 = vmatprep.subr.bf16.mxu0 0
    %2286 = vmatpush1.bf16.msra.mxu0 %v2260
    %2287 = vmatprep.subr.bf16.mxu0 0
    %2288 = vmatpush1.bf16.msra.mxu0 %v2259
    %2289 = vmatprep.subr.bf16.mxu0 0
    %2290 = vmatpush2.bf16.msra.mxu0 0
    %2291 = vmatprep.subr.bf16.mxu0 0
    %2292 = vmatpush2.bf16.msra.mxu0 0
    %2293 = vmatprep.subr.bf16.mxu0 0
    %2294 = vmatpush2.bf16.msra.mxu0 0
    %2295 = vmatprep.subr.bf16.mxu0 0
    %2296 = vmatpush2.bf16.msra.mxu0 0
    %2297 = vmatprep.subr.bf16.mxu0 0
    %2298 = vmatpush2.bf16.msra.mxu0 0
    %2299 = vmatprep.subr.bf16.mxu0 0
    %2300 = vmatpush2.bf16.msra.mxu0 0
    %2301 = vmatprep.subr.bf16.mxu0 0
    %2302 = vmatpush2.bf16.msra.mxu0 0
    %2303 = vmatprep.subr.bf16.mxu0 0
    %2304 = vmatpush2.bf16.msra.mxu0 0
    %2305 = vmatprep.mubr.bf16.mxu0 0
    %2306 = vmatmul.mubr.bf16.gmra.mxu0 %v2268
    %v2307 = vpop.f32.mrf.mxu0
    %v2308 = vadd.f32 %v2241, %v2307
    %v2309 = vpop.f32.mrf.mxu0
    %v2310 = vpop.f32.mrf.mxu0
    %v2311 = vadd.f32 %v2241, %v2310
    %v2312 = vpop.f32.mrf.mxu0
    %2313 = vmatprep.mubr.bf16.mxu0 0
    %2314 = vmatmul.mubr.bf16.gmra.mxu0 %v2271
    %v2315 = vpop.f32.mrf.mxu0
    %v2316 = vadd.f32 %v2241, %v2315
    %v2317 = vpop.f32.mrf.mxu0
    %v2318 = vpop.f32.mrf.mxu0
    %v2319 = vadd.f32 %v2241, %v2318
    %v2320 = vpop.f32.mrf.mxu0
    %2321 = vdwg.mxu0
    %2322 = vst.msk [vmem:[%s7] sm:$0xff] %vm46, %v2308
    %2323 = vst.msk [vmem:[%s7 + $0x8] sm:$0xff] %vm46, %v2311
    %2324 = vst.msk [vmem:[%s7 + $0x10] sm:$0xff] %vm46, %v2316
    %2325 = vst.msk [vmem:[%s7 + $0x18] sm:$0xff] %vm46, %v2319
    // Predicated region
    $region34: #{tpu_custom_call.1} parent=1 // pred_check
      _
    $region35: #{tpu_custom_call.1} parent=1 // pred_check_branch
      %2327 = sbr.rel (0) target = $region37
    $region36: #{tpu_custom_call.1} parent=1 // pred_region
      _
    $region37: #{tpu_custom_call.1} parent=1 // pred_fallthru
      _
    // Predicated region
    $region38: #{tpu_custom_call.1} parent=1 // pred_check
      _
    $region39: #{tpu_custom_call.1} parent=1 // pred_check_branch
      %2329 = sbr.rel (0) target = $region41
    $region40: #{tpu_custom_call.1} parent=1 // pred_region
      _
    $region41: #{tpu_custom_call.1} parent=1 // pred_fallthru
      _
    %2330 = vsyncpa [#allocation3], 1

</llo_original>
